<compile_context>
chip_gen: v6e
topology: v6e:2x2x1
jax: 0.10.0
libtpu: 0.0.40
codegen_flags: <defaults>
</compile_context>

<pallas_src>
import math
from functools import partial

import jax
import jax.numpy as jnp
from jax.experimental import pallas as pl
from jax.experimental.pallas import tpu as pltpu


def _upsample_conv_kernel(x_ref, w_ref, b_ref, o_ref, rhs_ref, *, H, W):
    # x_ref  : (Cin, T + 2*(W+1))  zero-padded, spatially-flattened input (one batch element)
    # w_ref  : (4, tco, 4*Cin)     parity-folded conv weights (tap-major along the last axis)
    # b_ref  : (tco, 1)            conv bias for this Cout tile
    # o_ref  : (4, tco, T)         per-parity output slabs (lane-dense, T = H*W)
    # rhs_ref: (4*Cin, T) f32      VMEM scratch: im2col slab for the current parity
    cin = x_ref.shape[0]
    T = H * W
    base = W + 1

    col = jax.lax.broadcasted_iota(jnp.int32, (1, T), 1) % W
    mask_l = (col != 0).astype(jnp.float32)        # kills the column wrap for ox == -1
    mask_r = (col != W - 1).astype(jnp.float32)    # kills the column wrap for ox == +1

    bias = b_ref[...].astype(jnp.float32)

    for p in range(4):                 # output sub-pixel parity p = 2*a + b
        pa, pb = p // 2, p % 2
        # Build the (4*Cin, T) im2col slab for this parity (4 folded taps).
        for u in range(2):
            for v in range(2):
                oy = pa - 1 + u        # row offset in original resolution
                ox = pb - 1 + v        # col offset in original resolution
                xs = x_ref[:, pl.ds(base + oy * W + ox, T)].astype(jnp.float32)
                if ox == -1:
                    xs = xs * mask_l
                elif ox == 1:
                    xs = xs * mask_r
                rhs_ref[pl.ds((2 * u + v) * cin, cin), :] = xs
        # One MXU matmul per parity, contraction depth = 4*Cin.
        acc = jnp.dot(w_ref[p].astype(jnp.float32), rhs_ref[...],
                      preferred_element_type=jnp.float32)
        o_ref[p] = (acc + bias).astype(o_ref.dtype)


def _upsample_copy_kernel(x_ref, o_ref):
    # Nearest x2 without conv: every sub-pixel parity slab is the original image.
    v = x_ref[...]
    for p in range(4):
        o_ref[p] = v


def _fold_upsample_into_conv(w):
    """w: (Cout, Cin, 3, 3) OIHW.  Returns (4, Cout, 4*Cin): for each output parity p = 2a+b a
    matrix whose contraction axis is ordered [tap q = 2u+v (2x2 offsets), Cin]."""
    cout, cin = w.shape[0], w.shape[1]
    # r[parity, offset-index, kernel-tap]: which 3x3 taps collapse onto each +-1/0 offset.
    r = jnp.array([[[1.0, 0.0, 0.0],
                    [0.0, 1.0, 1.0]],
                   [[1.0, 1.0, 0.0],
                    [0.0, 0.0, 1.0]]], dtype=w.dtype)
    weff = jnp.einsum('aud,bve,ocde->abuvoc', r, r, w)      # (2,2,2,2,Cout,Cin)
    return weff.transpose(0, 1, 4, 2, 3, 5).reshape(4, cout, 4 * cin)


def upsample_forward(x, params=None, use_conv=True):
    """x: (B, Cin, H, W).  Nearest x2 upsample, then optional Conv2d(Cin, Cout, 3, padding=1)."""
    B, Cin, H, W = x.shape
    T = H * W
    x3 = x.reshape(B, Cin, T)

    if use_conv:
        w, bvec = params["w"], params["b"]
        Cout = w.shape[0]
        assert w.shape[1] == Cin, "conv in_channels mismatch"
        w_fold = _fold_upsample_into_conv(w)                 # (4, Cout, 4*Cin)
        bias = bvec.reshape(Cout, 1)
        x_pad = jnp.pad(x3, ((0, 0), (0, 0), (W + 1, W + 1)))
        Tp = T + 2 * (W + 1)

        # Second parallel grid axis over output-channel tiles: keeps the per-step weight block
        # small and the input block resident across the tile axis.
        tco = 128 if Cout % 128 == 0 else Cout
        nco = Cout // tco

        kernel = partial(_upsample_conv_kernel, H=H, W=W)
        out_p = pl.pallas_call(
            kernel,
            out_shape=jax.ShapeDtypeStruct((B, 4, Cout, T), x.dtype),
            grid_spec=pltpu.PrefetchScalarGridSpec(
                num_scalar_prefetch=0,
                grid=(B, nco),
                in_specs=[
                    pl.BlockSpec((None, Cin, Tp), lambda bi, ci: (bi, 0, 0)),
                    pl.BlockSpec((4, tco, 4 * Cin), lambda bi, ci: (0, ci, 0)),
                    pl.BlockSpec((tco, 1), lambda bi, ci: (ci, 0)),
                ],
                out_specs=pl.BlockSpec((None, 4, tco, T), lambda bi, ci: (bi, 0, ci, 0)),
                scratch_shapes=[pltpu.VMEM((4 * Cin, T), jnp.float32)],
            ),
            compiler_params=pltpu.CompilerParams(
                dimension_semantics=("parallel", "parallel"),
                vmem_limit_bytes=48 * 1024 * 1024),
        )(x_pad, w_fold, bias)
    else:
        Cout = Cin
        out_p = pl.pallas_call(
            _upsample_copy_kernel,
            out_shape=jax.ShapeDtypeStruct((B, 4, Cin, T), x.dtype),
            grid_spec=pltpu.PrefetchScalarGridSpec(
                num_scalar_prefetch=0,
                grid=(B,),
                in_specs=[pl.BlockSpec((None, Cin, T), lambda bi: (bi, 0, 0))],
                out_specs=pl.BlockSpec((None, 4, Cin, T), lambda bi: (bi, 0, 0, 0)),
            ),
            compiler_params=pltpu.CompilerParams(dimension_semantics=("parallel",)),
        )(x3)

    # Parity -> spatial interleave: pure layout plumbing done by XLA outside the kernel so the
    # kernel's stores stay lane-dense.  out[:, :, 2i+a, 2j+b] = out_p[:, 2a+b, :, i*W+j].
    out = out_p.reshape(B, 2, 2, Cout, H, W).transpose(0, 3, 4, 1, 5, 2)
    return out.reshape(B, Cout, 2 * H, 2 * W)


def upsample_reference(x, params=None, use_conv=True):
    """Pure-JAX reference with identical semantics (nearest x2 + Conv2d pad=1)."""
    xu = jnp.repeat(jnp.repeat(x, 2, axis=2), 2, axis=3)
    if not use_conv:
        return xu
    w, b = params["w"], params["b"]
    y = jax.lax.conv_general_dilated(
        xu, w, window_strides=(1, 1), padding=((1, 1), (1, 1)),
        dimension_numbers=('NCHW', 'OIHW', 'NCHW'),
        precision=jax.lax.Precision.HIGHEST)
    return y + b.reshape(1, -1, 1, 1)


if __name__ == "__main__":
    key = jax.random.PRNGKey(0)
    kx, kw, kb = jax.random.split(key, 3)

    B, Cin, Cout, Hs, Ws = 2, 32, 64, 16, 16
    x = jax.random.normal(kx, (B, Cin, Hs, Ws), jnp.float32)

    bound = 1.0 / math.sqrt(Cin * 9)     # mirrors nn.Conv2d default init scale
    params = {
        "w": jax.random.uniform(kw, (Cout, Cin, 3, 3), jnp.float32, -bound, bound),
        "b": jax.random.uniform(kb, (Cout,), jnp.float32, -bound, bound),
    }

    # use_conv=True path (upsample fused with the 3x3 conv)
    out = jax.block_until_ready(upsample_forward(x, params, use_conv=True))
    ref = upsample_reference(x, params, use_conv=True)
    assert out.shape == (B, Cout, 2 * Hs, 2 * Ws) and out.dtype == x.dtype
    assert jnp.allclose(out, ref, atol=1e-4, rtol=1e-4), float(jnp.max(jnp.abs(out - ref)))

    # use_conv=False path (pure nearest upsample)
    out_nc = jax.block_until_ready(upsample_forward(x, None, use_conv=False))
    ref_nc = upsample_reference(x, None, use_conv=False)
    assert out_nc.shape == (B, Cin, 2 * Hs, 2 * Ws)
    assert jnp.allclose(out_nc, ref_nc)

    print("KERNEL_OK")
</pallas_src>

<mosaic_0001>
module attributes {stable_mosaic.version = 11 : i64} {
  func.func @_upsample_conv_kernel(%arg0: i32, %arg1: i32, %arg2: memref<1x32x290xf32, #tpu.memory_space<vmem>>, %arg3: memref<4x64x128xf32, #tpu.memory_space<vmem>>, %arg4: memref<64x1xf32, #tpu.memory_space<vmem>>, %arg5: memref<1x4x64x256xf32, #tpu.memory_space<vmem>>, %arg6: memref<128x256xf32, #tpu.memory_space<vmem>>) attributes {dimension_semantics = [#tpu.dimension_semantics<parallel>, #tpu.dimension_semantics<parallel>], iteration_bounds = array<i64: 2, 1>, scalar_prefetch = 0 : i64, scratch_operands = 1 : i64, tpu.core_type = #tpu.core_type<tc>, window_params = [{transform_indices = @transform_0, window_bounds = array<i64: 1, 32, 290>}, {transform_indices = @transform_1, window_bounds = array<i64: 4, 64, 128>}, {transform_indices = @transform_2, window_bounds = array<i64: 64, 1>}, {transform_indices = @transform_3, window_bounds = array<i64: 1, 4, 64, 256>}]} {
    %0 = tpu.iota {dimensions = array<i32: 1>} : vector<1x256xi32>
    %c16_i32 = arith.constant 16 : i32
    %c0_i32 = arith.constant 0 : i32
    %1 = arith.cmpi eq, %c16_i32, %c0_i32 : i32
    %c1_i32 = arith.constant 1 : i32
    %2 = arith.select %1, %c1_i32, %c16_i32 : i32
    %3 = vector.broadcast %2 : i32 to vector<1x256xi32>
    %4 = arith.remsi %0, %3 : vector<1x256xi32>
    %c0_i32_0 = arith.constant 0 : i32
    %5 = vector.broadcast %c0_i32_0 : i32 to vector<1x256xi32>
    %6 = arith.cmpi ne, %4, %5 : vector<1x256xi32>
    %c0_i32_1 = arith.constant 0 : i32
    %7 = vector.broadcast %c0_i32_1 : i32 to vector<1x256xi32>
    %8 = arith.cmpi slt, %4, %7 : vector<1x256xi32>
    %c0_i32_2 = arith.constant 0 : i32
    %9 = arith.cmpi slt, %2, %c0_i32_2 : i32
    %10 = vector.broadcast %9 : i1 to vector<1x256xi1>
    %11 = vector.broadcast %10 : vector<1x256xi1> to vector<1x256xi1>
    %12 = arith.xori %8, %11 : vector<1x256xi1>
    %13 = arith.andi %12, %6 : vector<1x256xi1>
    %14 = vector.broadcast %2 : i32 to vector<1x256xi32>
    %15 = arith.addi %4, %14 : vector<1x256xi32>
    %16 = arith.select %13, %15, %4 : vector<1x256xi1>, vector<1x256xi32>
    %c0_i32_3 = arith.constant 0 : i32
    %17 = vector.broadcast %c0_i32_3 : i32 to vector<1x256xi32>
    %18 = arith.cmpi ne, %16, %17 : vector<1x256xi32>
    %19 = arith.extui %18 : vector<1x256xi1> to vector<1x256xi32>
    %20 = arith.sitofp %19 : vector<1x256xi32> to vector<1x256xf32>
    %c15_i32 = arith.constant 15 : i32
    %21 = vector.broadcast %c15_i32 : i32 to vector<1x256xi32>
    %22 = arith.cmpi ne, %16, %21 : vector<1x256xi32>
    %23 = arith.extui %22 : vector<1x256xi1> to vector<1x256xi32>
    %24 = arith.sitofp %23 : vector<1x256xi32> to vector<1x256xf32>
    %c0 = arith.constant 0 : index
    %c0_4 = arith.constant 0 : index
    %25 = vector.load %arg4[%c0, %c0_4] : memref<64x1xf32, #tpu.memory_space<vmem>>, vector<64x1xf32>
    %c0_5 = arith.constant 0 : index
    %c0_6 = arith.constant 0 : index
    %c0_7 = arith.constant 0 : index
    %26 = vector.load %arg2[%c0_5, %c0_6, %c0_7] : memref<1x32x290xf32, #tpu.memory_space<vmem>>, vector<1x32x256xf32>
    %27 = vector.shape_cast %26 : vector<1x32x256xf32> to vector<32x256xf32>
    %28 = vector.broadcast %20 : vector<1x256xf32> to vector<32x256xf32>
    %29 = arith.mulf %27, %28 : vector<32x256xf32>
    %c0_8 = arith.constant 0 : index
    %c0_9 = arith.constant 0 : index
    %30 = vector.load %arg6[%c0_8, %c0_9] : memref<128x256xf32, #tpu.memory_space<vmem>>, vector<32x256xf32>
    tpu.vector_store %arg6[%c0_8, %c0_9], %29 {strides = array<i32>} : memref<128x256xf32, #tpu.memory_space<vmem>>, vector<32x256xf32>,
    %c0_10 = arith.constant 0 : index
    %c0_11 = arith.constant 0 : index
    %c1 = arith.constant 1 : index
    %31 = vector.load %arg2[%c0_10, %c0_11, %c1] : memref<1x32x290xf32, #tpu.memory_space<vmem>>, vector<1x32x256xf32>
    %32 = vector.shape_cast %31 : vector<1x32x256xf32> to vector<32x256xf32>
    %c32 = arith.constant 32 : index
    %c0_12 = arith.constant 0 : index
    %33 = vector.load %arg6[%c32, %c0_12] : memref<128x256xf32, #tpu.memory_space<vmem>>, vector<32x256xf32>
    tpu.vector_store %arg6[%c32, %c0_12], %32 {strides = array<i32>} : memref<128x256xf32, #tpu.memory_space<vmem>>, vector<32x256xf32>,
    %c0_13 = arith.constant 0 : index
    %c0_14 = arith.constant 0 : index
    %c16 = arith.constant 16 : index
    %34 = vector.load %arg2[%c0_13, %c0_14, %c16] : memref<1x32x290xf32, #tpu.memory_space<vmem>>, vector<1x32x256xf32>
    %35 = vector.shape_cast %34 : vector<1x32x256xf32> to vector<32x256xf32>
    %36 = vector.broadcast %20 : vector<1x256xf32> to vector<32x256xf32>
    %37 = arith.mulf %35, %36 : vector<32x256xf32>
    %c64 = arith.constant 64 : index
    %c0_15 = arith.constant 0 : index
    %38 = vector.load %arg6[%c64, %c0_15] : memref<128x256xf32, #tpu.memory_space<vmem>>, vector<32x256xf32>
    tpu.vector_store %arg6[%c64, %c0_15], %37 {strides = array<i32>} : memref<128x256xf32, #tpu.memory_space<vmem>>, vector<32x256xf32>,
    %c0_16 = arith.constant 0 : index
    %c0_17 = arith.constant 0 : index
    %c17 = arith.constant 17 : index
    %39 = vector.load %arg2[%c0_16, %c0_17, %c17] : memref<1x32x290xf32, #tpu.memory_space<vmem>>, vector<1x32x256xf32>
    %40 = vector.shape_cast %39 : vector<1x32x256xf32> to vector<32x256xf32>
    %c96 = arith.constant 96 : index
    %c0_18 = arith.constant 0 : index
    %41 = vector.load %arg6[%c96, %c0_18] : memref<128x256xf32, #tpu.memory_space<vmem>>, vector<32x256xf32>
    tpu.vector_store %arg6[%c96, %c0_18], %40 {strides = array<i32>} : memref<128x256xf32, #tpu.memory_space<vmem>>, vector<32x256xf32>,
    %c0_19 = arith.constant 0 : index
    %c0_20 = arith.constant 0 : index
    %c0_21 = arith.constant 0 : index
    %42 = vector.load %arg3[%c0_19, %c0_20, %c0_21] : memref<4x64x128xf32, #tpu.memory_space<vmem>>, vector<1x64x128xf32>
    %43 = vector.shape_cast %42 : vector<1x64x128xf32> to vector<64x128xf32>
    %c0_22 = arith.constant 0 : index
    %c0_23 = arith.constant 0 : index
    %44 = vector.load %arg6[%c0_22, %c0_23] : memref<128x256xf32, #tpu.memory_space<vmem>>, vector<128x256xf32>
    %cst = arith.constant dense<0.000000e+00> : vector<64x256xf32>
    %45 = tpu.matmul %43, %44, %cst {dimension_numbers = #tpu.dot_dimension_numbers<[1], [0], [0], [1], [0, 0, 1, 1], [], []>} : vector<64x128xf32>, vector<128x256xf32>, vector<64x256xf32> -> vector<64x256xf32>
    %46 = vector.broadcast %25 : vector<64x1xf32> to vector<64x256xf32>
    %47 = arith.addf %45, %46 : vector<64x256xf32>
    %c0_24 = arith.constant 0 : index
    %c0_25 = arith.constant 0 : index
    %c0_26 = arith.constant 0 : index
    %c0_27 = arith.constant 0 : index
    %48 = vector.load %arg5[%c0_24, %c0_25, %c0_26, %c0_27] : memref<1x4x64x256xf32, #tpu.memory_space<vmem>>, vector<1x1x64x256xf32>
    %49 = vector.shape_cast %48 : vector<1x1x64x256xf32> to vector<64x256xf32>
    %50 = vector.shape_cast %47 : vector<64x256xf32> to vector<1x1x64x256xf32>
    tpu.vector_store %arg5[%c0_24, %c0_25, %c0_26, %c0_27], %50 {strides = array<i32>} : memref<1x4x64x256xf32, #tpu.memory_space<vmem>>, vector<1x1x64x256xf32>,
    %c0_28 = arith.constant 0 : index
    %c0_29 = arith.constant 0 : index
    %c1_30 = arith.constant 1 : index
    %51 = vector.load %arg2[%c0_28, %c0_29, %c1_30] : memref<1x32x290xf32, #tpu.memory_space<vmem>>, vector<1x32x256xf32>
    %52 = vector.shape_cast %51 : vector<1x32x256xf32> to vector<32x256xf32>
    %c0_31 = arith.constant 0 : index
    %c0_32 = arith.constant 0 : index
    %53 = vector.load %arg6[%c0_31, %c0_32] : memref<128x256xf32, #tpu.memory_space<vmem>>, vector<32x256xf32>
    tpu.vector_store %arg6[%c0_31, %c0_32], %52 {strides = array<i32>} : memref<128x256xf32, #tpu.memory_space<vmem>>, vector<32x256xf32>,
    %c0_33 = arith.constant 0 : index
    %c0_34 = arith.constant 0 : index
    %c2 = arith.constant 2 : index
    %54 = vector.load %arg2[%c0_33, %c0_34, %c2] : memref<1x32x290xf32, #tpu.memory_space<vmem>>, vector<1x32x256xf32>
    %55 = vector.shape_cast %54 : vector<1x32x256xf32> to vector<32x256xf32>
    %56 = vector.broadcast %24 : vector<1x256xf32> to vector<32x256xf32>
    %57 = arith.mulf %55, %56 : vector<32x256xf32>
    %c32_35 = arith.constant 32 : index
    %c0_36 = arith.constant 0 : index
    %58 = vector.load %arg6[%c32_35, %c0_36] : memref<128x256xf32, #tpu.memory_space<vmem>>, vector<32x256xf32>
    tpu.vector_store %arg6[%c32_35, %c0_36], %57 {strides = array<i32>} : memref<128x256xf32, #tpu.memory_space<vmem>>, vector<32x256xf32>,
    %c0_37 = arith.constant 0 : index
    %c0_38 = arith.constant 0 : index
    %c17_39 = arith.constant 17 : index
    %59 = vector.load %arg2[%c0_37, %c0_38, %c17_39] : memref<1x32x290xf32, #tpu.memory_space<vmem>>, vector<1x32x256xf32>
    %60 = vector.shape_cast %59 : vector<1x32x256xf32> to vector<32x256xf32>
    %c64_40 = arith.constant 64 : index
    %c0_41 = arith.constant 0 : index
    %61 = vector.load %arg6[%c64_40, %c0_41] : memref<128x256xf32, #tpu.memory_space<vmem>>, vector<32x256xf32>
    tpu.vector_store %arg6[%c64_40, %c0_41], %60 {strides = array<i32>} : memref<128x256xf32, #tpu.memory_space<vmem>>, vector<32x256xf32>,
    %c0_42 = arith.constant 0 : index
    %c0_43 = arith.constant 0 : index
    %c18 = arith.constant 18 : index
    %62 = vector.load %arg2[%c0_42, %c0_43, %c18] : memref<1x32x290xf32, #tpu.memory_space<vmem>>, vector<1x32x256xf32>
    %63 = vector.shape_cast %62 : vector<1x32x256xf32> to vector<32x256xf32>
    %64 = vector.broadcast %24 : vector<1x256xf32> to vector<32x256xf32>
    %65 = arith.mulf %63, %64 : vector<32x256xf32>
    %c96_44 = arith.constant 96 : index
    %c0_45 = arith.constant 0 : index
    %66 = vector.load %arg6[%c96_44, %c0_45] : memref<128x256xf32, #tpu.memory_space<vmem>>, vector<32x256xf32>
    tpu.vector_store %arg6[%c96_44, %c0_45], %65 {strides = array<i32>} : memref<128x256xf32, #tpu.memory_space<vmem>>, vector<32x256xf32>,
    %c1_46 = arith.constant 1 : index
    %c0_47 = arith.constant 0 : index
    %c0_48 = arith.constant 0 : index
    %67 = vector.load %arg3[%c1_46, %c0_47, %c0_48] : memref<4x64x128xf32, #tpu.memory_space<vmem>>, vector<1x64x128xf32>
    %68 = vector.shape_cast %67 : vector<1x64x128xf32> to vector<64x128xf32>
    %c0_49 = arith.constant 0 : index
    %c0_50 = arith.constant 0 : index
    %69 = vector.load %arg6[%c0_49, %c0_50] : memref<128x256xf32, #tpu.memory_space<vmem>>, vector<128x256xf32>
    %cst_51 = arith.constant dense<0.000000e+00> : vector<64x256xf32>
    %70 = tpu.matmul %68, %69, %cst_51 {dimension_numbers = #tpu.dot_dimension_numbers<[1], [0], [0], [1], [0, 0, 1, 1], [], []>} : vector<64x128xf32>, vector<128x256xf32>, vector<64x256xf32> -> vector<64x256xf32>
    %71 = vector.broadcast %25 : vector<64x1xf32> to vector<64x256xf32>
    %72 = arith.addf %70, %71 : vector<64x256xf32>
    %c0_52 = arith.constant 0 : index
    %c1_53 = arith.constant 1 : index
    %c0_54 = arith.constant 0 : index
    %c0_55 = arith.constant 0 : index
    %73 = vector.load %arg5[%c0_52, %c1_53, %c0_54, %c0_55] : memref<1x4x64x256xf32, #tpu.memory_space<vmem>>, vector<1x1x64x256xf32>
    %74 = vector.shape_cast %73 : vector<1x1x64x256xf32> to vector<64x256xf32>
    %75 = vector.shape_cast %72 : vector<64x256xf32> to vector<1x1x64x256xf32>
    tpu.vector_store %arg5[%c0_52, %c1_53, %c0_54, %c0_55], %75 {strides = array<i32>} : memref<1x4x64x256xf32, #tpu.memory_space<vmem>>, vector<1x1x64x256xf32>,
    %c0_56 = arith.constant 0 : index
    %c0_57 = arith.constant 0 : index
    %c16_58 = arith.constant 16 : index
    %76 = vector.load %arg2[%c0_56, %c0_57, %c16_58] : memref<1x32x290xf32, #tpu.memory_space<vmem>>, vector<1x32x256xf32>
    %77 = vector.shape_cast %76 : vector<1x32x256xf32> to vector<32x256xf32>
    %78 = vector.broadcast %20 : vector<1x256xf32> to vector<32x256xf32>
    %79 = arith.mulf %77, %78 : vector<32x256xf32>
    %c0_59 = arith.constant 0 : index
    %c0_60 = arith.constant 0 : index
    %80 = vector.load %arg6[%c0_59, %c0_60] : memref<128x256xf32, #tpu.memory_space<vmem>>, vector<32x256xf32>
    tpu.vector_store %arg6[%c0_59, %c0_60], %79 {strides = array<i32>} : memref<128x256xf32, #tpu.memory_space<vmem>>, vector<32x256xf32>,
    %c0_61 = arith.constant 0 : index
    %c0_62 = arith.constant 0 : index
    %c17_63 = arith.constant 17 : index
    %81 = vector.load %arg2[%c0_61, %c0_62, %c17_63] : memref<1x32x290xf32, #tpu.memory_space<vmem>>, vector<1x32x256xf32>
    %82 = vector.shape_cast %81 : vector<1x32x256xf32> to vector<32x256xf32>
    %c32_64 = arith.constant 32 : index
    %c0_65 = arith.constant 0 : index
    %83 = vector.load %arg6[%c32_64, %c0_65] : memref<128x256xf32, #tpu.memory_space<vmem>>, vector<32x256xf32>
    tpu.vector_store %arg6[%c32_64, %c0_65], %82 {strides = array<i32>} : memref<128x256xf32, #tpu.memory_space<vmem>>, vector<32x256xf32>,
    %c0_66 = arith.constant 0 : index
    %c0_67 = arith.constant 0 : index
    %c32_68 = arith.constant 32 : index
    %84 = vector.load %arg2[%c0_66, %c0_67, %c32_68] : memref<1x32x290xf32, #tpu.memory_space<vmem>>, vector<1x32x256xf32>
    %85 = vector.shape_cast %84 : vector<1x32x256xf32> to vector<32x256xf32>
    %86 = vector.broadcast %20 : vector<1x256xf32> to vector<32x256xf32>
    %87 = arith.mulf %85, %86 : vector<32x256xf32>
    %c64_69 = arith.constant 64 : index
    %c0_70 = arith.constant 0 : index
    %88 = vector.load %arg6[%c64_69, %c0_70] : memref<128x256xf32, #tpu.memory_space<vmem>>, vector<32x256xf32>
    tpu.vector_store %arg6[%c64_69, %c0_70], %87 {strides = array<i32>} : memref<128x256xf32, #tpu.memory_space<vmem>>, vector<32x256xf32>,
    %c0_71 = arith.constant 0 : index
    %c0_72 = arith.constant 0 : index
    %c33 = arith.constant 33 : index
    %89 = vector.load %arg2[%c0_71, %c0_72, %c33] : memref<1x32x290xf32, #tpu.memory_space<vmem>>, vector<1x32x256xf32>
    %90 = vector.shape_cast %89 : vector<1x32x256xf32> to vector<32x256xf32>
    %c96_73 = arith.constant 96 : index
    %c0_74 = arith.constant 0 : index
    %91 = vector.load %arg6[%c96_73, %c0_74] : memref<128x256xf32, #tpu.memory_space<vmem>>, vector<32x256xf32>
    tpu.vector_store %arg6[%c96_73, %c0_74], %90 {strides = array<i32>} : memref<128x256xf32, #tpu.memory_space<vmem>>, vector<32x256xf32>,
    %c2_75 = arith.constant 2 : index
    %c0_76 = arith.constant 0 : index
    %c0_77 = arith.constant 0 : index
    %92 = vector.load %arg3[%c2_75, %c0_76, %c0_77] : memref<4x64x128xf32, #tpu.memory_space<vmem>>, vector<1x64x128xf32>
    %93 = vector.shape_cast %92 : vector<1x64x128xf32> to vector<64x128xf32>
    %c0_78 = arith.constant 0 : index
    %c0_79 = arith.constant 0 : index
    %94 = vector.load %arg6[%c0_78, %c0_79] : memref<128x256xf32, #tpu.memory_space<vmem>>, vector<128x256xf32>
    %cst_80 = arith.constant dense<0.000000e+00> : vector<64x256xf32>
    %95 = tpu.matmul %93, %94, %cst_80 {dimension_numbers = #tpu.dot_dimension_numbers<[1], [0], [0], [1], [0, 0, 1, 1], [], []>} : vector<64x128xf32>, vector<128x256xf32>, vector<64x256xf32> -> vector<64x256xf32>
    %96 = vector.broadcast %25 : vector<64x1xf32> to vector<64x256xf32>
    %97 = arith.addf %95, %96 : vector<64x256xf32>
    %c0_81 = arith.constant 0 : index
    %c2_82 = arith.constant 2 : index
    %c0_83 = arith.constant 0 : index
    %c0_84 = arith.constant 0 : index
    %98 = vector.load %arg5[%c0_81, %c2_82, %c0_83, %c0_84] : memref<1x4x64x256xf32, #tpu.memory_space<vmem>>, vector<1x1x64x256xf32>
    %99 = vector.shape_cast %98 : vector<1x1x64x256xf32> to vector<64x256xf32>
    %100 = vector.shape_cast %97 : vector<64x256xf32> to vector<1x1x64x256xf32>
    tpu.vector_store %arg5[%c0_81, %c2_82, %c0_83, %c0_84], %100 {strides = array<i32>} : memref<1x4x64x256xf32, #tpu.memory_space<vmem>>, vector<1x1x64x256xf32>,
    %c0_85 = arith.constant 0 : index
    %c0_86 = arith.constant 0 : index
    %c17_87 = arith.constant 17 : index
    %101 = vector.load %arg2[%c0_85, %c0_86, %c17_87] : memref<1x32x290xf32, #tpu.memory_space<vmem>>, vector<1x32x256xf32>
    %102 = vector.shape_cast %101 : vector<1x32x256xf32> to vector<32x256xf32>
    %c0_88 = arith.constant 0 : index
    %c0_89 = arith.constant 0 : index
    %103 = vector.load %arg6[%c0_88, %c0_89] : memref<128x256xf32, #tpu.memory_space<vmem>>, vector<32x256xf32>
    tpu.vector_store %arg6[%c0_88, %c0_89], %102 {strides = array<i32>} : memref<128x256xf32, #tpu.memory_space<vmem>>, vector<32x256xf32>,
    %c0_90 = arith.constant 0 : index
    %c0_91 = arith.constant 0 : index
    %c18_92 = arith.constant 18 : index
    %104 = vector.load %arg2[%c0_90, %c0_91, %c18_92] : memref<1x32x290xf32, #tpu.memory_space<vmem>>, vector<1x32x256xf32>
    %105 = vector.shape_cast %104 : vector<1x32x256xf32> to vector<32x256xf32>
    %106 = vector.broadcast %24 : vector<1x256xf32> to vector<32x256xf32>
    %107 = arith.mulf %105, %106 : vector<32x256xf32>
    %c32_93 = arith.constant 32 : index
    %c0_94 = arith.constant 0 : index
    %108 = vector.load %arg6[%c32_93, %c0_94] : memref<128x256xf32, #tpu.memory_space<vmem>>, vector<32x256xf32>
    tpu.vector_store %arg6[%c32_93, %c0_94], %107 {strides = array<i32>} : memref<128x256xf32, #tpu.memory_space<vmem>>, vector<32x256xf32>,
    %c0_95 = arith.constant 0 : index
    %c0_96 = arith.constant 0 : index
    %c33_97 = arith.constant 33 : index
    %109 = vector.load %arg2[%c0_95, %c0_96, %c33_97] : memref<1x32x290xf32, #tpu.memory_space<vmem>>, vector<1x32x256xf32>
    %110 = vector.shape_cast %109 : vector<1x32x256xf32> to vector<32x256xf32>
    %c64_98 = arith.constant 64 : index
    %c0_99 = arith.constant 0 : index
    %111 = vector.load %arg6[%c64_98, %c0_99] : memref<128x256xf32, #tpu.memory_space<vmem>>, vector<32x256xf32>
    tpu.vector_store %arg6[%c64_98, %c0_99], %110 {strides = array<i32>} : memref<128x256xf32, #tpu.memory_space<vmem>>, vector<32x256xf32>,
    %c0_100 = arith.constant 0 : index
    %c0_101 = arith.constant 0 : index
    %c34 = arith.constant 34 : index
    %112 = vector.load %arg2[%c0_100, %c0_101, %c34] : memref<1x32x290xf32, #tpu.memory_space<vmem>>, vector<1x32x256xf32>
    %113 = vector.shape_cast %112 : vector<1x32x256xf32> to vector<32x256xf32>
    %114 = vector.broadcast %24 : vector<1x256xf32> to vector<32x256xf32>
    %115 = arith.mulf %113, %114 : vector<32x256xf32>
    %c96_102 = arith.constant 96 : index
    %c0_103 = arith.constant 0 : index
    %116 = vector.load %arg6[%c96_102, %c0_103] : memref<128x256xf32, #tpu.memory_space<vmem>>, vector<32x256xf32>
    tpu.vector_store %arg6[%c96_102, %c0_103], %115 {strides = array<i32>} : memref<128x256xf32, #tpu.memory_space<vmem>>, vector<32x256xf32>,
    %c3 = arith.constant 3 : index
    %c0_104 = arith.constant 0 : index
    %c0_105 = arith.constant 0 : index
    %117 = vector.load %arg3[%c3, %c0_104, %c0_105] : memref<4x64x128xf32, #tpu.memory_space<vmem>>, vector<1x64x128xf32>
    %118 = vector.shape_cast %117 : vector<1x64x128xf32> to vector<64x128xf32>
    %c0_106 = arith.constant 0 : index
    %c0_107 = arith.constant 0 : index
    %119 = vector.load %arg6[%c0_106, %c0_107] : memref<128x256xf32, #tpu.memory_space<vmem>>, vector<128x256xf32>
    %cst_108 = arith.constant dense<0.000000e+00> : vector<64x256xf32>
    %120 = tpu.matmul %118, %119, %cst_108 {dimension_numbers = #tpu.dot_dimension_numbers<[1], [0], [0], [1], [0, 0, 1, 1], [], []>} : vector<64x128xf32>, vector<128x256xf32>, vector<64x256xf32> -> vector<64x256xf32>
    %121 = vector.broadcast %25 : vector<64x1xf32> to vector<64x256xf32>
    %122 = arith.addf %120, %121 : vector<64x256xf32>
    %c0_109 = arith.constant 0 : index
    %c3_110 = arith.constant 3 : index
    %c0_111 = arith.constant 0 : index
    %c0_112 = arith.constant 0 : index
    %123 = vector.load %arg5[%c0_109, %c3_110, %c0_111, %c0_112] : memref<1x4x64x256xf32, #tpu.memory_space<vmem>>, vector<1x1x64x256xf32>
    %124 = vector.shape_cast %123 : vector<1x1x64x256xf32> to vector<64x256xf32>
    %125 = vector.shape_cast %122 : vector<64x256xf32> to vector<1x1x64x256xf32>
    tpu.vector_store %arg5[%c0_109, %c3_110, %c0_111, %c0_112], %125 {strides = array<i32>} : memref<1x4x64x256xf32, #tpu.memory_space<vmem>>, vector<1x1x64x256xf32>,
    return
  }
  func.func @transform_0(%arg0: i32, %arg1: i32) -> (i32, i32, i32) {
    %c0_i32 = arith.constant 0 : i32
    %c0_i32_0 = arith.constant 0 : i32
    %c0_i32_1 = arith.constant 0 : i32
    return %arg0, %c0_i32, %c0_i32_0 : i32, i32, i32
  }
  func.func @transform_1(%arg0: i32, %arg1: i32) -> (i32, i32, i32) {
    %c0_i32 = arith.constant 0 : i32
    %c0_i32_0 = arith.constant 0 : i32
    %c0_i32_1 = arith.constant 0 : i32
    return %c0_i32, %arg1, %c0_i32_0 : i32, i32, i32
  }
  func.func @transform_2(%arg0: i32, %arg1: i32) -> (i32, i32) {
    %c0_i32 = arith.constant 0 : i32
    %c0_i32_0 = arith.constant 0 : i32
    return %arg1, %c0_i32 : i32, i32
  }
  func.func @transform_3(%arg0: i32, %arg1: i32) -> (i32, i32, i32, i32) {
    %c0_i32 = arith.constant 0 : i32
    %c0_i32_0 = arith.constant 0 : i32
    %c0_i32_1 = arith.constant 0 : i32
    return %arg0, %c0_i32, %arg1, %c0_i32_0 : i32, i32, i32, i32
  }
}

</mosaic_0001>

<llo_original>
// kernel: tpu_custom_call.1
$region0: #{tpu_custom_call.1}
  #allocation0 [shape = 'u32[]', space=smem, size = 0x4, offset = 0x4, fixed_abs, tag = 'smem constant byte address 0x4 - core index']
  #allocation1 [shape = 'u32[144,128]{1,0:T(1,128)}', space=vmem, size = 0x12000, scoped, tag = 'internal scratch']
  #allocation2 [shape = 'f32[128,256]{1,0:T(8,128)}', space=vmem, size = 0x20000, scoped, tag = 'scratch operand']
  %s0 = inlined_call_operand.hbm [shape: f32[2,32,290], index: 0, kind: input, shape index: {}]
  %s1 = inlined_call_operand.hbm [shape: f32[4,64,128], index: 1, kind: input, shape index: {}]
  %s2 = inlined_call_operand.vmem [shape: f32[64,1], index: 2, kind: input, shape index: {}]
  %s3 = inlined_call_operand.hbm [shape: f32[2,4,64,256], index: 3, kind: output, shape index: {}]
  %s4 = sld [smem:[#allocation0]]
  $region53: #{tpu_custom_call.1} parent=0
    _
  %s6 = ssub.s32 1, %s4
  %s7 = scalar_select 0, %s6, %s4
  $region1: #{tpu_custom_call.1} parent=0
    #allocation3 [shape = 'u8[98304]{0}', space=vmem, size = 0x18000, scoped, tag = 'input window, operand 0']
    #allocation4 [shape = 's32[2]{0}', space=sflag, size = 0x8, scoped, tag = 'scoped memory for tpu_custom_call.1']
    #allocation5 [shape = 's32[2]{0}', space=sflag, size = 0x8, scoped, tag = 'scoped memory for tpu_custom_call.1']
    #allocation6 [shape = 'u8[131072]{0}', space=vmem, size = 0x20000, scoped, tag = 'input window, operand 1, single buffered']
    #allocation7 [shape = 's32[1]{0}', space=sflag, size = 0x4, scoped, tag = 'scoped memory for tpu_custom_call.1']
    #allocation8 [shape = 'u8[524288]{0}', space=vmem, size = 0x80000, scoped, tag = 'output window, operand 0']
    %8 = vsyncpa [#allocation4], 0
    %s9 = scalar_lea.sflag [#allocation4], 1
    %10 = vsyncpa %s9, 0
    %11 = vsyncpa [#allocation7], 0
    %12 = vsyncpa [#allocation5], 0
    %s13 = scalar_lea.sflag [#allocation5], 1
    %14 = vsyncpa %s13, 0
    loop: start=0, step=1, limit=4
    $region2: #{tpu_custom_call.1} parent=1 // loop_pre_header
      _
    $region3: #{tpu_custom_call.1} parent=1 // loop_header
      %s16 = sphi 0, %s20
      %p17 = scmp.ge.s32.totalorder %s16, 4
      %s23 = sphi 0, %s35
      %s24 = sphi 0, %s31
      %s25 = sphi 0, %s23
      %s26 = sphi 0, %s24
      %s27 = sphi 0, %s25
      %s28 = sphi 0, %s26
      %s38 = sphi 0, %s40
      %s41 = sphi 0, %s38
      %s42 = sphi 0, %s41
      %s58 = sphi 0, %s42
      %s64 = sphi 0, %s66
      %s67 = sphi 0, %s64
      %s68 = sphi 0, %s67
      %s84 = sphi 0, %s68
      %s90 = sphi 0, %s92
      %s93 = sphi 0, %s90
      %s94 = sphi 0, %s93
      %s110 = sphi 0, %s94
      %s118 = sphi 0, %s120
      %s121 = sphi 0, %s118
      %s122 = sphi 0, %s121
      %s138 = sphi 0, %s122
    $region4: #{tpu_custom_call.1} parent=1 // loop_header_branch
      %19 = sbr.rel (%p17) target = $region8
    $region5: #{tpu_custom_call.1} parent=1 // loop_body
      %s21 = ssub.s32 %s16, 1
      %s22 = ssub.s32 %s16, 2
      %s29 = sadd.s32 1, %s24
      %p30 = scmp.ge.s32.totalorder %s29, 1
      %s31 = scalar_select %p30, 0, %s29
      %s32 = sadd.s32 1, %s23
      %s33 = scalar_select %p30, %s32, %s23
      %p34 = scmp.ge.s32.totalorder %s33, 2
      %s35 = scalar_select %p34, 0, %s33
      %s36 = ssub.s32 %s23, %s35
      %p37 = scmp.eq.s32.totalorder %s36, 0
      %s39 = sadd.s32 %s38, 1
      %s40 = scalar_select %p37, %s38, %s39
      %p43 = pneg %p37
      %p44 = scmp.eq.s32.totalorder %s16, 1
      %p45 = por %p43, %p44
      %p46 = scmp.ne.s32.totalorder %s38, %s41
      %p47 = scmp.eq.s32.totalorder %s16, 0
      %p48 = por %p46, %p47
      %p49 = scmp.ne.s32.totalorder %s38, %s41
      %p50 = scmp.eq.s32.totalorder %s21, 1
      %p51 = por %p49, %p50
      %p52 = scmp.ne.s32.totalorder %s41, %s42
      %p53 = scmp.eq.s32.totalorder %s21, 0
      %p54 = por %p52, %p53
      %p55 = scmp.ne.s32.totalorder %s41, %s42
      %p56 = scmp.eq.s32.totalorder %s22, 1
      %p57 = por %p55, %p56
      %p59 = scmp.ne.s32.totalorder %s42, %s58
      %p60 = scmp.eq.s32.totalorder %s22, 0
      %p61 = por %p59, %p60
      %s62 = ssub.s32 %s24, %s31
      %p63 = scmp.eq.s32.totalorder %s62, 0
      %s65 = sadd.s32 %s64, 1
      %s66 = scalar_select %p63, %s64, %s65
      %p69 = pneg %p63
      %p70 = scmp.eq.s32.totalorder %s16, 1
      %p71 = por %p69, %p70
      %p72 = scmp.ne.s32.totalorder %s64, %s67
      %p73 = scmp.eq.s32.totalorder %s16, 0
      %p74 = por %p72, %p73
      %p75 = scmp.ne.s32.totalorder %s64, %s67
      %p76 = scmp.eq.s32.totalorder %s21, 1
      %p77 = por %p75, %p76
      %p78 = scmp.ne.s32.totalorder %s67, %s68
      %p79 = scmp.eq.s32.totalorder %s21, 0
      %p80 = por %p78, %p79
      %p81 = scmp.ne.s32.totalorder %s67, %s68
      %p82 = scmp.eq.s32.totalorder %s22, 1
      %p83 = por %p81, %p82
      %p85 = scmp.ne.s32.totalorder %s68, %s84
      %p86 = scmp.eq.s32.totalorder %s22, 0
      %p87 = por %p85, %p86
      %s88 = ssub.s32 %s24, %s31
      %p89 = scmp.eq.s32.totalorder %s88, 0
      %s91 = sadd.s32 %s90, 1
      %s92 = scalar_select %p89, %s90, %s91
      %p95 = pneg %p89
      %p96 = scmp.eq.s32.totalorder %s16, 1
      %p97 = por %p95, %p96
      %p98 = scmp.ne.s32.totalorder %s90, %s93
      %p99 = scmp.eq.s32.totalorder %s16, 0
      %p100 = por %p98, %p99
      %p101 = scmp.ne.s32.totalorder %s90, %s93
      %p102 = scmp.eq.s32.totalorder %s21, 1
      %p103 = por %p101, %p102
      %p104 = scmp.ne.s32.totalorder %s93, %s94
      %p105 = scmp.eq.s32.totalorder %s21, 0
      %p106 = por %p104, %p105
      %p107 = scmp.ne.s32.totalorder %s93, %s94
      %p108 = scmp.eq.s32.totalorder %s22, 1
      %p109 = por %p107, %p108
      %p111 = scmp.ne.s32.totalorder %s94, %s110
      %p112 = scmp.eq.s32.totalorder %s22, 0
      %p113 = por %p111, %p112
      %s114 = ssub.s32 %s23, %s35
      %s115 = ssub.s32 %s24, %s31
      %s116 = sor.u32 %s114, %s115
      %p117 = scmp.eq.s32.totalorder %s116, 0
      %s119 = sadd.s32 %s118, 1
      %s120 = scalar_select %p117, %s118, %s119
      %p123 = pneg %p117
      %p124 = scmp.eq.s32.totalorder %s16, 1
      %p125 = por %p123, %p124
      %p126 = scmp.ne.s32.totalorder %s118, %s121
      %p127 = scmp.eq.s32.totalorder %s16, 0
      %p128 = por %p126, %p127
      %p129 = scmp.ne.s32.totalorder %s118, %s121
      %p130 = scmp.eq.s32.totalorder %s21, 1
      %p131 = por %p129, %p130
      %p132 = scmp.ne.s32.totalorder %s121, %s122
      %p133 = scmp.eq.s32.totalorder %s21, 0
      %p134 = por %p132, %p133
      %p135 = scmp.ne.s32.totalorder %s121, %s122
      %p136 = scmp.eq.s32.totalorder %s22, 1
      %p137 = por %p135, %p136
      %p139 = scmp.ne.s32.totalorder %s122, %s138
      %p140 = scmp.eq.s32.totalorder %s22, 0
      %p141 = por %p139, %p140
      %p142 = scmp.le.s32.totalorder 1, %s16
      %p143 = scmp.lt.s32.totalorder %s16, 3
      %p144 = pnand %p142, %p143
      %p145 = pneg %p144
      // Predicated region
      $region9: #{tpu_custom_call.1} parent=5 // pred_check
        _
      $region10: #{tpu_custom_call.1} parent=5 // pred_check_branch
        %147 = sbr.rel (%p144) target = $region12
      $region11: #{tpu_custom_call.1} parent=5 // pred_region
        %s148 = ssub.s32 %s16, 1
        // Predicated region
        $region13: #{tpu_custom_call.1} parent=11 // pred_check
          %p149 = pneg %p80
        $region14: #{tpu_custom_call.1} parent=11 // pred_check_branch
          %151 = sbr.rel (%p149) target = $region16
        $region15: #{tpu_custom_call.1} parent=11 // pred_region
          %s152 = smul.u32 8, %s26
          %s154 = ssub.s32 4096, 4096
          %155 = vsyncadd [#allocation7], %s154
          %s156 = smul.addr %s152, 128
          %s157 = scalar_lea.hbm %s1, %s156
          %s158 = sshll.u32 [#allocation6], 4
          %s159 = int_to_ptr.vmem [resolvable:$true] %s158
          %164 = dma.hbm_to_vmem [thread:$0]  %s157, 4096, %s159, [#allocation7], 128, 128, 8
        $region16: #{tpu_custom_call.1} parent=11 // pred_fallthru
          _
        // Predicated region
        $region17: #{tpu_custom_call.1} parent=11 // pred_check
          %p165 = pneg %p106
        $region18: #{tpu_custom_call.1} parent=11 // pred_check_branch
          %167 = sbr.rel (%p165) target = $region20
        $region19: #{tpu_custom_call.1} parent=11 // pred_region
          %s168 = smul.u32 8, %s26
          %p169 = scmp.lt.s32.totalorder %s168, 7
          %s170 = scalar_select %p169, %s168, 7
          %s171 = smul.addr %s170, 8
          %s172 = scalar_lea.vmem %s2, %s171
          %s173 = smul.u32 8, %s26
        $region20: #{tpu_custom_call.1} parent=11 // pred_fallthru
          _
      $region12: #{tpu_custom_call.1} parent=5 // pred_fallthru
        _
      %p174 = scmp.lt.s32.totalorder %s16, 2
      // Predicated region
      $region21: #{tpu_custom_call.1} parent=5 // pred_check
        %p175 = pneg %p174
      $region22: #{tpu_custom_call.1} parent=5 // pred_check_branch
        %177 = sbr.rel (%p175) target = $region24
      $region23: #{tpu_custom_call.1} parent=5 // pred_region
        // Predicated region
        $region25: #{tpu_custom_call.1} parent=23 // pred_check
          %p178 = pneg %p48
        $region26: #{tpu_custom_call.1} parent=23 // pred_check_branch
          %180 = sbr.rel (%p178) target = $region28
        $region27: #{tpu_custom_call.1} parent=23 // pred_region
          %s181 = sand.u32 %s38, 1
          %s182 = scalar_lea.sflag [#allocation4], %s181
          %s183 = sand.u32 %s38, 1
          %s184 = smul.addr %s183, 96
          %s185 = scalar_lea.vmem [#allocation3], %s184
          %s187 = ssub.s32 1536, 1536
          %188 = vsyncadd %s182, %s187
          %s189 = smul.addr %s23, 12
          %s190 = smul.addr %s189, 128
          %s191 = scalar_lea.hbm %s0, %s190
          %s192 = sshll.u32 %s185, 4
          %s193 = int_to_ptr.vmem [resolvable:$true] %s192
          %198 = dma.hbm_to_vmem [thread:$0]  %s191, 1536, %s193, %s182, 384, 384, 24
        $region28: #{tpu_custom_call.1} parent=23 // pred_fallthru
          _
      $region24: #{tpu_custom_call.1} parent=5 // pred_fallthru
        _
      %p199 = scmp.le.s32.totalorder 1, %s16
      %p200 = scmp.lt.s32.totalorder %s16, 3
      %p201 = pnand %p199, %p200
      %p202 = pneg %p201
      // Predicated region
      $region29: #{tpu_custom_call.1} parent=5 // pred_check
        _
      $region30: #{tpu_custom_call.1} parent=5 // pred_check_branch
        %204 = sbr.rel (%p201) target = $region32
      $region31: #{tpu_custom_call.1} parent=5 // pred_region
        %s205 = ssub.s32 %s16, 1
        %s206 = sand.u32 %s41, 1
        %s207 = scalar_lea.sflag [#allocation4], %s206
        %s208 = sand.u32 %s41, 1
        %s209 = smul.addr %s208, 96
        %s210 = scalar_lea.vmem [#allocation3], %s209
        // Predicated region
        $region33: #{tpu_custom_call.1} parent=31 // pred_check
          %p211 = pneg %p54
        $region34: #{tpu_custom_call.1} parent=31 // pred_check_branch
          %213 = sbr.rel (%p211) target = $region36
        $region35: #{tpu_custom_call.1} parent=31 // pred_region
          %214 = dma.done %s207, 1536
        $region36: #{tpu_custom_call.1} parent=31 // pred_fallthru
          _
        // Predicated region
        $region37: #{tpu_custom_call.1} parent=31 // pred_check
          %p215 = pneg %p80
        $region38: #{tpu_custom_call.1} parent=31 // pred_check_branch
          %217 = sbr.rel (%p215) target = $region40
        $region39: #{tpu_custom_call.1} parent=31 // pred_region
          %218 = dma.done [#allocation7], 4096
        $region40: #{tpu_custom_call.1} parent=31 // pred_fallthru
          _
        %s219 = sand.u32 %s41, 1
        %s220 = scalar_lea.sflag [#allocation4], %s219
        %s221 = sand.u32 %s41, 1
        %s222 = smul.addr %s221, 96
        %s223 = scalar_lea.vmem [#allocation3], %s222
        %p224 = pneg %p54
        %p225 = pneg %p51
        %p226 = pneg %p80
        %p227 = pneg %p77
        %s228 = smul.u32 8, %s26
        %p229 = scmp.lt.s32.totalorder %s228, 7
        %s230 = scalar_select %p229, %s228, 7
        %s231 = smul.addr %s230, 8
        %s232 = scalar_lea.vmem %s2, %s231
        %p233 = pneg %p106
        %p234 = pneg %p103
        %p235 = pneg %p134
        %p236 = pneg %p131
        %s237 = sand.u32 %s121, 1
        %s238 = scalar_lea.sflag [#allocation5], %s237
        %s239 = sand.u32 %s121, 1
        %s240 = smul.addr %s239, 512
        %s241 = scalar_lea.vmem [#allocation8], %s240
        %s242 = smul.u32 8, %s26
        %s243 = smul.u32 8, %s26
        %p244 = scmp.lt.s32.totalorder %s243, 7
        %s245 = scalar_select %p244, %s243, 7
        %s246 = smul.addr %s245, 8
        %s247 = scalar_lea.vmem %s2, %s246
        %s248 = smul.u32 8, %s26
        %s249 = smul.u32 8, %s26
        %v250 = vlaneseq
        %v251 = vand.u32 %v250, 127
        %v252 = vadd.s32 %v251, 128
        %vm253 = vcmp.lt.s32.totalorder %v251, 0
        %v254 = vsub.s32 0, %v251
        %v255 = vsel %vm253, %v254, %v251
        %v256 = vshrl.u32 %v255, 4
        %v257 = vand.u32 %v255, 15
        %v258 = vsub.s32 0, %v257
        %v259 = vsel %vm253, %v258, %v257
        %vm260 = vcmp.lt.s32.totalorder %v252, 0
        %v261 = vsub.s32 0, %v252
        %v262 = vsel %vm260, %v261, %v252
        %v263 = vshrl.u32 %v262, 4
        %v264 = vand.u32 %v262, 15
        %v265 = vsub.s32 0, %v264
        %v266 = vsel %vm260, %v265, %v264
        %vm267 = vcmp.ne.s32.totalorder %v259, 0
        %vm268 = vcmp.ne.s32.totalorder %v266, 0
        %vm269 = vcmp.lt.s32.totalorder %v259, 0
        %vm270 = vcmp.lt.s32.totalorder %v266, 0
        %vm271 = vmand %vm269, %vm267
        %vm272 = vmand %vm270, %vm268
        %v273 = vadd.s32 %v259, 16
        %v274 = vadd.s32 %v266, 16
        %v275 = vsel %vm271, %v273, %v259
        %v276 = vsel %vm272, %v274, %v266
        %vm277 = vcmp.ne.s32.totalorder %v275, 0
        %vm278 = vcmp.ne.s32.totalorder %v276, 0
        %v279 = vsel %vm277, 1, 0
        %v280 = vsel %vm278, 1, 0
        %v281 = vcvt.s32.f32 %v279
        %v282 = vcvt.s32.f32 %v280
        %vm283 = vcmp.ne.s32.totalorder %v275, 15
        %vm284 = vcmp.ne.s32.totalorder %v276, 15
        %v285 = vsel %vm283, 1, 0
        %v286 = vsel %vm284, 1, 0
        %v287 = vcvt.s32.f32 %v285
        %v288 = vcvt.s32.f32 %v286
        %v289 = vld [vmem:[%s247] sm:$0xff]
        %v290 = vld [vmem:[%s247 + $0x8] sm:$0xff]
        %v291 = vld [vmem:[%s247 + $0x10] sm:$0xff]
        %v292 = vld [vmem:[%s247 + $0x18] sm:$0xff]
        %v293 = vld [vmem:[%s247 + $0x20] sm:$0xff]
        %v294 = vld [vmem:[%s247 + $0x28] sm:$0xff]
        %v295 = vld [vmem:[%s247 + $0x30] sm:$0xff]
        %v296 = vld [vmem:[%s247 + $0x38] sm:$0xff]
        %v297 = vld [vmem:[%s210] sm:$0xff]
        %v298 = vld [vmem:[%s210 + $0x8] sm:$0xff]
        %v299 = vld [vmem:[%s210 + $0x18] sm:$0xff]
        %v300 = vld [vmem:[%s210 + $0x20] sm:$0xff]
        %v301 = vld [vmem:[%s210 + $0x30] sm:$0xff]
        %v302 = vld [vmem:[%s210 + $0x38] sm:$0xff]
        %v303 = vld [vmem:[%s210 + $0x48] sm:$0xff]
        %v304 = vld [vmem:[%s210 + $0x50] sm:$0xff]
        %v305 = vmul.f32 %v297, %v281
        %v306 = vmul.f32 %v298, %v282
        %v307 = vmul.f32 %v299, %v281
        %v308 = vmul.f32 %v300, %v282
        %v309 = vmul.f32 %v301, %v281
        %v310 = vmul.f32 %v302, %v282
        %v311 = vmul.f32 %v303, %v281
        %v312 = vmul.f32 %v304, %v282
        %313 = vst [vmem:[#allocation2] sm:$0xff] %v305
        %314 = vst [vmem:[#allocation2 + $0x8] sm:$0xff] %v306
        %315 = vst [vmem:[#allocation2 + $0x10] sm:$0xff] %v307
        %316 = vst [vmem:[#allocation2 + $0x18] sm:$0xff] %v308
        %317 = vst [vmem:[#allocation2 + $0x20] sm:$0xff] %v309
        %318 = vst [vmem:[#allocation2 + $0x28] sm:$0xff] %v310
        %319 = vst [vmem:[#allocation2 + $0x30] sm:$0xff] %v311
        %320 = vst [vmem:[#allocation2 + $0x38] sm:$0xff] %v312
        %v321 = vld [vmem:[%s210] sm:$0xff]
        %v322 = vld [vmem:[%s210 + $0x8] sm:$0xff]
        %v323 = vld [vmem:[%s210 + $0x10] sm:$0xff]
        %v324 = vld [vmem:[%s210 + $0x18] sm:$0xff]
        %v325 = vld [vmem:[%s210 + $0x20] sm:$0xff]
        %v326 = vld [vmem:[%s210 + $0x28] sm:$0xff]
        %v327 = vld [vmem:[%s210 + $0x30] sm:$0xff]
        %v328 = vld [vmem:[%s210 + $0x38] sm:$0xff]
        %v329 = vld [vmem:[%s210 + $0x40] sm:$0xff]
        %v330 = vld [vmem:[%s210 + $0x48] sm:$0xff]
        %v331 = vld [vmem:[%s210 + $0x50] sm:$0xff]
        %v332 = vld [vmem:[%s210 + $0x58] sm:$0xff]
        %345 = vrot.lane.b32.xlu0 %v321, 127
        %v346 = vpop.permute.xlu0 %345
        %347 = vrot.lane.b32.xlu0 %v322, 127
        %v348 = vpop.permute.xlu0 %347
        %349 = vrot.lane.b32.xlu0 %v323, 127
        %v350 = vpop.permute.xlu0 %349
        %351 = vrot.lane.b32.xlu0 %v324, 127
        %v352 = vpop.permute.xlu0 %351
        %353 = vrot.lane.b32.xlu0 %v325, 127
        %v354 = vpop.permute.xlu0 %353
        %355 = vrot.lane.b32.xlu0 %v326, 127
        %v356 = vpop.permute.xlu0 %355
        %357 = vrot.lane.b32.xlu0 %v327, 127
        %v358 = vpop.permute.xlu0 %357
        %359 = vrot.lane.b32.xlu0 %v328, 127
        %v360 = vpop.permute.xlu0 %359
        %361 = vrot.lane.b32.xlu0 %v329, 127
        %v362 = vpop.permute.xlu0 %361
        %363 = vrot.lane.b32.xlu0 %v330, 127
        %v364 = vpop.permute.xlu0 %363
        %365 = vrot.lane.b32.xlu0 %v331, 127
        %v366 = vpop.permute.xlu0 %365
        %367 = vrot.lane.b32.xlu0 %v332, 127
        %v368 = vpop.permute.xlu0 %367
        %vm369 = vcmask 1039360
        %v370 = vsel %vm369, %v346, %v348
        %v371 = vsel %vm369, %v348, %v350
        %v372 = vsel %vm369, %v352, %v354
        %v373 = vsel %vm369, %v354, %v356
        %v374 = vsel %vm369, %v358, %v360
        %v375 = vsel %vm369, %v360, %v362
        %v376 = vsel %vm369, %v364, %v366
        %v377 = vsel %vm369, %v366, %v368
        %386 = vst [vmem:[#allocation2 + $0x40] sm:$0xff] %v370
        %387 = vst [vmem:[#allocation2 + $0x48] sm:$0xff] %v371
        %388 = vst [vmem:[#allocation2 + $0x50] sm:$0xff] %v372
        %389 = vst [vmem:[#allocation2 + $0x58] sm:$0xff] %v373
        %390 = vst [vmem:[#allocation2 + $0x60] sm:$0xff] %v374
        %391 = vst [vmem:[#allocation2 + $0x68] sm:$0xff] %v375
        %392 = vst [vmem:[#allocation2 + $0x70] sm:$0xff] %v376
        %393 = vst [vmem:[#allocation2 + $0x78] sm:$0xff] %v377
        %v394 = vld [vmem:[%s210] sm:$0xff]
        %v395 = vld [vmem:[%s210 + $0x8] sm:$0xff]
        %v396 = vld [vmem:[%s210 + $0x10] sm:$0xff]
        %v397 = vld [vmem:[%s210 + $0x18] sm:$0xff]
        %v398 = vld [vmem:[%s210 + $0x20] sm:$0xff]
        %v399 = vld [vmem:[%s210 + $0x28] sm:$0xff]
        %v400 = vld [vmem:[%s210 + $0x30] sm:$0xff]
        %v401 = vld [vmem:[%s210 + $0x38] sm:$0xff]
        %v402 = vld [vmem:[%s210 + $0x40] sm:$0xff]
        %v403 = vld [vmem:[%s210 + $0x48] sm:$0xff]
        %v404 = vld [vmem:[%s210 + $0x50] sm:$0xff]
        %v405 = vld [vmem:[%s210 + $0x58] sm:$0xff]
        %408 = vrot.lane.b32.xlu0 %v281, 16
        %v409 = vpop.permute.xlu0 %408
        %410 = vrot.lane.b32.xlu0 %v282, 16
        %v411 = vpop.permute.xlu0 %410
        %vm412 = vcmask 130048
        %v413 = vsel %vm412, %v409, %v411
        %v417 = vmul.f32 %v394, %v409
        %v418 = vmul.f32 %v395, %v413
        %v419 = vmul.f32 %v396, %v411
        %v420 = vmul.f32 %v397, %v409
        %v421 = vmul.f32 %v398, %v413
        %v422 = vmul.f32 %v399, %v411
        %v423 = vmul.f32 %v400, %v409
        %v424 = vmul.f32 %v401, %v413
        %v425 = vmul.f32 %v402, %v411
        %v426 = vmul.f32 %v403, %v409
        %v427 = vmul.f32 %v404, %v413
        %v428 = vmul.f32 %v405, %v411
        %441 = vrot.lane.b32.xlu0 %v417, 112
        %v442 = vpop.permute.xlu0 %441
        %443 = vrot.lane.b32.xlu0 %v418, 112
        %v444 = vpop.permute.xlu0 %443
        %445 = vrot.lane.b32.xlu0 %v419, 112
        %v446 = vpop.permute.xlu0 %445
        %447 = vrot.lane.b32.xlu0 %v420, 112
        %v448 = vpop.permute.xlu0 %447
        %449 = vrot.lane.b32.xlu0 %v421, 112
        %v450 = vpop.permute.xlu0 %449
        %451 = vrot.lane.b32.xlu0 %v422, 112
        %v452 = vpop.permute.xlu0 %451
        %453 = vrot.lane.b32.xlu0 %v423, 112
        %v454 = vpop.permute.xlu0 %453
        %455 = vrot.lane.b32.xlu0 %v424, 112
        %v456 = vpop.permute.xlu0 %455
        %457 = vrot.lane.b32.xlu0 %v425, 112
        %v458 = vpop.permute.xlu0 %457
        %459 = vrot.lane.b32.xlu0 %v426, 112
        %v460 = vpop.permute.xlu0 %459
        %461 = vrot.lane.b32.xlu0 %v427, 112
        %v462 = vpop.permute.xlu0 %461
        %463 = vrot.lane.b32.xlu0 %v428, 112
        %v464 = vpop.permute.xlu0 %463
        %vm465 = vcmask 916480
        %v466 = vsel %vm465, %v442, %v444
        %v467 = vsel %vm465, %v444, %v446
        %v468 = vsel %vm465, %v448, %v450
        %v469 = vsel %vm465, %v450, %v452
        %v470 = vsel %vm465, %v454, %v456
        %v471 = vsel %vm465, %v456, %v458
        %v472 = vsel %vm465, %v460, %v462
        %v473 = vsel %vm465, %v462, %v464
        %482 = vst [vmem:[#allocation2 + $0x80] sm:$0xff] %v466
        %483 = vst [vmem:[#allocation2 + $0x88] sm:$0xff] %v467
        %484 = vst [vmem:[#allocation2 + $0x90] sm:$0xff] %v468
        %485 = vst [vmem:[#allocation2 + $0x98] sm:$0xff] %v469
        %486 = vst [vmem:[#allocation2 + $0xa0] sm:$0xff] %v470
        %487 = vst [vmem:[#allocation2 + $0xa8] sm:$0xff] %v471
        %488 = vst [vmem:[#allocation2 + $0xb0] sm:$0xff] %v472
        %489 = vst [vmem:[#allocation2 + $0xb8] sm:$0xff] %v473
        %v490 = vld [vmem:[%s210] sm:$0xff]
        %v491 = vld [vmem:[%s210 + $0x8] sm:$0xff]
        %v492 = vld [vmem:[%s210 + $0x10] sm:$0xff]
        %v493 = vld [vmem:[%s210 + $0x18] sm:$0xff]
        %v494 = vld [vmem:[%s210 + $0x20] sm:$0xff]
        %v495 = vld [vmem:[%s210 + $0x28] sm:$0xff]
        %v496 = vld [vmem:[%s210 + $0x30] sm:$0xff]
        %v497 = vld [vmem:[%s210 + $0x38] sm:$0xff]
        %v498 = vld [vmem:[%s210 + $0x40] sm:$0xff]
        %v499 = vld [vmem:[%s210 + $0x48] sm:$0xff]
        %v500 = vld [vmem:[%s210 + $0x50] sm:$0xff]
        %v501 = vld [vmem:[%s210 + $0x58] sm:$0xff]
        %514 = vrot.lane.b32.xlu0 %v490, 111
        %v515 = vpop.permute.xlu0 %514
        %516 = vrot.lane.b32.xlu0 %v491, 111
        %v517 = vpop.permute.xlu0 %516
        %518 = vrot.lane.b32.xlu0 %v492, 111
        %v519 = vpop.permute.xlu0 %518
        %520 = vrot.lane.b32.xlu0 %v493, 111
        %v521 = vpop.permute.xlu0 %520
        %522 = vrot.lane.b32.xlu0 %v494, 111
        %v523 = vpop.permute.xlu0 %522
        %524 = vrot.lane.b32.xlu0 %v495, 111
        %v525 = vpop.permute.xlu0 %524
        %526 = vrot.lane.b32.xlu0 %v496, 111
        %v527 = vpop.permute.xlu0 %526
        %528 = vrot.lane.b32.xlu0 %v497, 111
        %v529 = vpop.permute.xlu0 %528
        %530 = vrot.lane.b32.xlu0 %v498, 111
        %v531 = vpop.permute.xlu0 %530
        %532 = vrot.lane.b32.xlu0 %v499, 111
        %v533 = vpop.permute.xlu0 %532
        %534 = vrot.lane.b32.xlu0 %v500, 111
        %v535 = vpop.permute.xlu0 %534
        %536 = vrot.lane.b32.xlu0 %v501, 111
        %v537 = vpop.permute.xlu0 %536
        %vm538 = vcmask 908288
        %v539 = vsel %vm538, %v515, %v517
        %v540 = vsel %vm538, %v517, %v519
        %v541 = vsel %vm538, %v521, %v523
        %v542 = vsel %vm538, %v523, %v525
        %v543 = vsel %vm538, %v527, %v529
        %v544 = vsel %vm538, %v529, %v531
        %v545 = vsel %vm538, %v533, %v535
        %v546 = vsel %vm538, %v535, %v537
        %555 = vst [vmem:[#allocation2 + $0xc0] sm:$0xff] %v539
        %556 = vst [vmem:[#allocation2 + $0xc8] sm:$0xff] %v540
        %557 = vst [vmem:[#allocation2 + $0xd0] sm:$0xff] %v541
        %558 = vst [vmem:[#allocation2 + $0xd8] sm:$0xff] %v542
        %559 = vst [vmem:[#allocation2 + $0xe0] sm:$0xff] %v543
        %560 = vst [vmem:[#allocation2 + $0xe8] sm:$0xff] %v544
        %561 = vst [vmem:[#allocation2 + $0xf0] sm:$0xff] %v545
        %562 = vst [vmem:[#allocation2 + $0xf8] sm:$0xff] %v546
        %v563 = vld [vmem:[#allocation6] sm:$0xff]
        %v564 = vld [vmem:[#allocation6 + $0x8] sm:$0xff]
        %v565 = vld [vmem:[#allocation6 + $0x10] sm:$0xff]
        %v566 = vld [vmem:[#allocation6 + $0x18] sm:$0xff]
        %v567 = vld [vmem:[#allocation6 + $0x20] sm:$0xff]
        %v568 = vld [vmem:[#allocation6 + $0x28] sm:$0xff]
        %v569 = vld [vmem:[#allocation6 + $0x30] sm:$0xff]
        %v570 = vld [vmem:[#allocation6 + $0x38] sm:$0xff]
        %v571 = vld [vmem:[#allocation2] sm:$0xff]
        %v572 = vld [vmem:[#allocation2 + $0x8] sm:$0xff]
        %v573 = vld [vmem:[#allocation2 + $0x10] sm:$0xff]
        %v574 = vld [vmem:[#allocation2 + $0x18] sm:$0xff]
        %v575 = vld [vmem:[#allocation2 + $0x20] sm:$0xff]
        %v576 = vld [vmem:[#allocation2 + $0x28] sm:$0xff]
        %v577 = vld [vmem:[#allocation2 + $0x30] sm:$0xff]
        %v578 = vld [vmem:[#allocation2 + $0x38] sm:$0xff]
        %v579 = vld [vmem:[#allocation2 + $0x40] sm:$0xff]
        %v580 = vld [vmem:[#allocation2 + $0x48] sm:$0xff]
        %v581 = vld [vmem:[#allocation2 + $0x50] sm:$0xff]
        %v582 = vld [vmem:[#allocation2 + $0x58] sm:$0xff]
        %v583 = vld [vmem:[#allocation2 + $0x60] sm:$0xff]
        %v584 = vld [vmem:[#allocation2 + $0x68] sm:$0xff]
        %v585 = vld [vmem:[#allocation2 + $0x70] sm:$0xff]
        %v586 = vld [vmem:[#allocation2 + $0x78] sm:$0xff]
        %v587 = vld [vmem:[#allocation2 + $0x80] sm:$0xff]
        %v588 = vld [vmem:[#allocation2 + $0x88] sm:$0xff]
        %v589 = vld [vmem:[#allocation2 + $0x90] sm:$0xff]
        %v590 = vld [vmem:[#allocation2 + $0x98] sm:$0xff]
        %v591 = vld [vmem:[#allocation2 + $0xa0] sm:$0xff]
        %v592 = vld [vmem:[#allocation2 + $0xa8] sm:$0xff]
        %v593 = vld [vmem:[#allocation2 + $0xb0] sm:$0xff]
        %v594 = vld [vmem:[#allocation2 + $0xb8] sm:$0xff]
        %v595 = vld [vmem:[#allocation2 + $0xc0] sm:$0xff]
        %v596 = vld [vmem:[#allocation2 + $0xc8] sm:$0xff]
        %v597 = vld [vmem:[#allocation2 + $0xd0] sm:$0xff]
        %v598 = vld [vmem:[#allocation2 + $0xd8] sm:$0xff]
        %v599 = vld [vmem:[#allocation2 + $0xe0] sm:$0xff]
        %v600 = vld [vmem:[#allocation2 + $0xe8] sm:$0xff]
        %v601 = vld [vmem:[#allocation2 + $0xf0] sm:$0xff]
        %v602 = vld [vmem:[#allocation2 + $0xf8] sm:$0xff]
        %604 = vset.pattern.permute.xlu0 0
        %605 = vperm.xlu0 %604, %v289
        %v606 = vpop.permute.xlu0 %605
        %609 = vset.pattern.permute.xlu0 0
        %610 = vperm.xlu0 %609, %v290
        %v611 = vpop.permute.xlu0 %610
        %614 = vset.pattern.permute.xlu0 0
        %615 = vperm.xlu0 %614, %v291
        %v616 = vpop.permute.xlu0 %615
        %619 = vset.pattern.permute.xlu0 0
        %620 = vperm.xlu0 %619, %v292
        %v621 = vpop.permute.xlu0 %620
        %624 = vset.pattern.permute.xlu0 0
        %625 = vperm.xlu0 %624, %v293
        %v626 = vpop.permute.xlu0 %625
        %629 = vset.pattern.permute.xlu0 0
        %630 = vperm.xlu0 %629, %v294
        %v631 = vpop.permute.xlu0 %630
        %634 = vset.pattern.permute.xlu0 0
        %635 = vperm.xlu0 %634, %v295
        %v636 = vpop.permute.xlu0 %635
        %639 = vset.pattern.permute.xlu0 0
        %640 = vperm.xlu0 %639, %v296
        %v641 = vpop.permute.xlu0 %640
        %643 = vmatprep.subr.mxu0 %v602
        %644 = vmatpush1.msra.mxu0 %v601
        %645 = vmatprep.subr.mxu0 %v600
        %646 = vmatpush1.msra.mxu0 %v599
        %647 = vmatprep.subr.mxu0 %v598
        %648 = vmatpush1.msra.mxu0 %v597
        %649 = vmatprep.subr.mxu0 %v596
        %650 = vmatpush1.msra.mxu0 %v595
        %651 = vmatprep.subr.mxu0 %v594
        %652 = vmatpush1.msra.mxu0 %v593
        %653 = vmatprep.subr.mxu0 %v592
        %654 = vmatpush1.msra.mxu0 %v591
        %655 = vmatprep.subr.mxu0 %v590
        %656 = vmatpush1.msra.mxu0 %v589
        %657 = vmatprep.subr.mxu0 %v588
        %658 = vmatpush1.msra.mxu0 %v587
        %659 = vmatprep.subr.mxu0 %v586
        %660 = vmatpush1.msra.mxu0 %v585
        %661 = vmatprep.subr.mxu0 %v584
        %662 = vmatpush1.msra.mxu0 %v583
        %663 = vmatprep.subr.mxu0 %v582
        %664 = vmatpush1.msra.mxu0 %v581
        %665 = vmatprep.subr.mxu0 %v580
        %666 = vmatpush1.msra.mxu0 %v579
        %667 = vmatprep.subr.mxu0 %v578
        %668 = vmatpush1.msra.mxu0 %v577
        %669 = vmatprep.subr.mxu0 %v576
        %670 = vmatpush1.msra.mxu0 %v575
        %671 = vmatprep.subr.mxu0 %v574
        %672 = vmatpush1.msra.mxu0 %v573
        %673 = vmatprep.subr.mxu0 %v572
        %674 = vmatpush1.msra.mxu0 %v571
        %675 = vmatprep.subr.mxu0 0.0
        %676 = vmatpush2.msra.mxu0 0.0
        %677 = vmatprep.subr.mxu0 0.0
        %678 = vmatpush2.msra.mxu0 0.0
        %679 = vmatprep.subr.mxu0 0.0
        %680 = vmatpush2.msra.mxu0 0.0
        %681 = vmatprep.subr.mxu0 0.0
        %682 = vmatpush2.msra.mxu0 0.0
        %683 = vmatprep.subr.mxu0 0.0
        %684 = vmatpush2.msra.mxu0 0.0
        %685 = vmatprep.subr.mxu0 0.0
        %686 = vmatpush2.msra.mxu0 0.0
        %687 = vmatprep.subr.mxu0 0.0
        %688 = vmatpush2.msra.mxu0 0.0
        %689 = vmatprep.subr.mxu0 0.0
        %690 = vmatpush2.msra.mxu0 0.0
        %691 = vmatprep.subr.mxu0 0.0
        %692 = vmatpush2.msra.mxu0 0.0
        %693 = vmatprep.subr.mxu0 0.0
        %694 = vmatpush2.msra.mxu0 0.0
        %695 = vmatprep.subr.mxu0 0.0
        %696 = vmatpush2.msra.mxu0 0.0
        %697 = vmatprep.subr.mxu0 0.0
        %698 = vmatpush2.msra.mxu0 0.0
        %699 = vmatprep.subr.mxu0 0.0
        %700 = vmatpush2.msra.mxu0 0.0
        %701 = vmatprep.subr.mxu0 0.0
        %702 = vmatpush2.msra.mxu0 0.0
        %703 = vmatprep.subr.mxu0 0.0
        %704 = vmatpush2.msra.mxu0 0.0
        %705 = vmatprep.subr.mxu0 0.0
        %706 = vmatpush2.msra.mxu0 0.0
        %707 = vmatprep.mubr.f32.mxu0 0.0
        %708 = vmatmul.mubr.f32.gmra.mxu0 %v563
        %v709 = vpop.f32.mrf.mxu0
        %v710 = vadd.f32 %v606, %v709
        %v711 = vpop.f32.mrf.mxu0
        %v712 = vadd.f32 %v606, %v711
        %713 = vmatprep.mubr.f32.mxu0 0.0
        %714 = vmatmul.mubr.f32.gmra.mxu0 %v564
        %v715 = vpop.f32.mrf.mxu0
        %v716 = vadd.f32 %v611, %v715
        %v717 = vpop.f32.mrf.mxu0
        %v718 = vadd.f32 %v611, %v717
        %719 = vmatprep.mubr.f32.mxu0 0.0
        %720 = vmatmul.mubr.f32.gmra.mxu0 %v565
        %v721 = vpop.f32.mrf.mxu0
        %v722 = vadd.f32 %v616, %v721
        %v723 = vpop.f32.mrf.mxu0
        %v724 = vadd.f32 %v616, %v723
        %725 = vmatprep.mubr.f32.mxu0 0.0
        %726 = vmatmul.mubr.f32.gmra.mxu0 %v566
        %v727 = vpop.f32.mrf.mxu0
        %v728 = vadd.f32 %v621, %v727
        %v729 = vpop.f32.mrf.mxu0
        %v730 = vadd.f32 %v621, %v729
        %731 = vmatprep.mubr.f32.mxu0 0.0
        %732 = vmatmul.mubr.f32.gmra.mxu0 %v567
        %v733 = vpop.f32.mrf.mxu0
        %v734 = vadd.f32 %v626, %v733
        %v735 = vpop.f32.mrf.mxu0
        %v736 = vadd.f32 %v626, %v735
        %737 = vmatprep.mubr.f32.mxu0 0.0
        %738 = vmatmul.mubr.f32.gmra.mxu0 %v568
        %v739 = vpop.f32.mrf.mxu0
        %v740 = vadd.f32 %v631, %v739
        %v741 = vpop.f32.mrf.mxu0
        %v742 = vadd.f32 %v631, %v741
        %743 = vmatprep.mubr.f32.mxu0 0.0
        %744 = vmatmul.mubr.f32.gmra.mxu0 %v569
        %v745 = vpop.f32.mrf.mxu0
        %v746 = vadd.f32 %v636, %v745
        %v747 = vpop.f32.mrf.mxu0
        %v748 = vadd.f32 %v636, %v747
        %749 = vmatprep.mubr.f32.mxu0 0.0
        %750 = vmatmul.mubr.f32.gmra.mxu0 %v570
        %v751 = vpop.f32.mrf.mxu0
        %v752 = vadd.f32 %v641, %v751
        %v753 = vpop.f32.mrf.mxu0
        %v754 = vadd.f32 %v641, %v753
        %755 = vdwg.mxu0
        %756 = vst [vmem:[%s241] sm:$0xff] %v710
        %757 = vst [vmem:[%s241 + $0x8] sm:$0xff] %v712
        %758 = vst [vmem:[%s241 + $0x10] sm:$0xff] %v716
        %759 = vst [vmem:[%s241 + $0x18] sm:$0xff] %v718
        %760 = vst [vmem:[%s241 + $0x20] sm:$0xff] %v722
        %761 = vst [vmem:[%s241 + $0x28] sm:$0xff] %v724
        %762 = vst [vmem:[%s241 + $0x30] sm:$0xff] %v728
        %763 = vst [vmem:[%s241 + $0x38] sm:$0xff] %v730
        %764 = vst [vmem:[%s241 + $0x40] sm:$0xff] %v734
        %765 = vst [vmem:[%s241 + $0x48] sm:$0xff] %v736
        %766 = vst [vmem:[%s241 + $0x50] sm:$0xff] %v740
        %767 = vst [vmem:[%s241 + $0x58] sm:$0xff] %v742
        %768 = vst [vmem:[%s241 + $0x60] sm:$0xff] %v746
        %769 = vst [vmem:[%s241 + $0x68] sm:$0xff] %v748
        %770 = vst [vmem:[%s241 + $0x70] sm:$0xff] %v752
        %771 = vst [vmem:[%s241 + $0x78] sm:$0xff] %v754
        %v772 = vld [vmem:[%s210] sm:$0xff]
        %v773 = vld [vmem:[%s210 + $0x8] sm:$0xff]
        %v774 = vld [vmem:[%s210 + $0x10] sm:$0xff]
        %v775 = vld [vmem:[%s210 + $0x18] sm:$0xff]
        %v776 = vld [vmem:[%s210 + $0x20] sm:$0xff]
        %v777 = vld [vmem:[%s210 + $0x28] sm:$0xff]
        %v778 = vld [vmem:[%s210 + $0x30] sm:$0xff]
        %v779 = vld [vmem:[%s210 + $0x38] sm:$0xff]
        %v780 = vld [vmem:[%s210 + $0x40] sm:$0xff]
        %v781 = vld [vmem:[%s210 + $0x48] sm:$0xff]
        %v782 = vld [vmem:[%s210 + $0x50] sm:$0xff]
        %v783 = vld [vmem:[%s210 + $0x58] sm:$0xff]
        %796 = vrot.lane.b32.xlu0 %v772, 127
        %v797 = vpop.permute.xlu0 %796
        %798 = vrot.lane.b32.xlu0 %v773, 127
        %v799 = vpop.permute.xlu0 %798
        %800 = vrot.lane.b32.xlu0 %v774, 127
        %v801 = vpop.permute.xlu0 %800
        %802 = vrot.lane.b32.xlu0 %v775, 127
        %v803 = vpop.permute.xlu0 %802
        %804 = vrot.lane.b32.xlu0 %v776, 127
        %v805 = vpop.permute.xlu0 %804
        %806 = vrot.lane.b32.xlu0 %v777, 127
        %v807 = vpop.permute.xlu0 %806
        %808 = vrot.lane.b32.xlu0 %v778, 127
        %v809 = vpop.permute.xlu0 %808
        %810 = vrot.lane.b32.xlu0 %v779, 127
        %v811 = vpop.permute.xlu0 %810
        %812 = vrot.lane.b32.xlu0 %v780, 127
        %v813 = vpop.permute.xlu0 %812
        %814 = vrot.lane.b32.xlu0 %v781, 127
        %v815 = vpop.permute.xlu0 %814
        %816 = vrot.lane.b32.xlu0 %v782, 127
        %v817 = vpop.permute.xlu0 %816
        %818 = vrot.lane.b32.xlu0 %v783, 127
        %v819 = vpop.permute.xlu0 %818
        %v820 = vsel %vm369, %v797, %v799
        %v821 = vsel %vm369, %v799, %v801
        %v822 = vsel %vm369, %v803, %v805
        %v823 = vsel %vm369, %v805, %v807
        %v824 = vsel %vm369, %v809, %v811
        %v825 = vsel %vm369, %v811, %v813
        %v826 = vsel %vm369, %v815, %v817
        %v827 = vsel %vm369, %v817, %v819
        %836 = vst [vmem:[#allocation2] sm:$0xff] %v820
        %837 = vst [vmem:[#allocation2 + $0x8] sm:$0xff] %v821
        %838 = vst [vmem:[#allocation2 + $0x10] sm:$0xff] %v822
        %839 = vst [vmem:[#allocation2 + $0x18] sm:$0xff] %v823
        %840 = vst [vmem:[#allocation2 + $0x20] sm:$0xff] %v824
        %841 = vst [vmem:[#allocation2 + $0x28] sm:$0xff] %v825
        %842 = vst [vmem:[#allocation2 + $0x30] sm:$0xff] %v826
        %843 = vst [vmem:[#allocation2 + $0x38] sm:$0xff] %v827
        %v844 = vld [vmem:[%s210] sm:$0xff]
        %v845 = vld [vmem:[%s210 + $0x8] sm:$0xff]
        %v846 = vld [vmem:[%s210 + $0x10] sm:$0xff]
        %v847 = vld [vmem:[%s210 + $0x18] sm:$0xff]
        %v848 = vld [vmem:[%s210 + $0x20] sm:$0xff]
        %v849 = vld [vmem:[%s210 + $0x28] sm:$0xff]
        %v850 = vld [vmem:[%s210 + $0x30] sm:$0xff]
        %v851 = vld [vmem:[%s210 + $0x38] sm:$0xff]
        %v852 = vld [vmem:[%s210 + $0x40] sm:$0xff]
        %v853 = vld [vmem:[%s210 + $0x48] sm:$0xff]
        %v854 = vld [vmem:[%s210 + $0x50] sm:$0xff]
        %v855 = vld [vmem:[%s210 + $0x58] sm:$0xff]
        %858 = vrot.lane.b32.xlu0 %v287, 2
        %v859 = vpop.permute.xlu0 %858
        %860 = vrot.lane.b32.xlu0 %v288, 2
        %v861 = vpop.permute.xlu0 %860
        %vm862 = vcmask 15360
        %v863 = vsel %vm862, %v859, %v861
        %v867 = vmul.f32 %v844, %v859
        %v868 = vmul.f32 %v845, %v863
        %v869 = vmul.f32 %v846, %v861
        %v870 = vmul.f32 %v847, %v859
        %v871 = vmul.f32 %v848, %v863
        %v872 = vmul.f32 %v849, %v861
        %v873 = vmul.f32 %v850, %v859
        %v874 = vmul.f32 %v851, %v863
        %v875 = vmul.f32 %v852, %v861
        %v876 = vmul.f32 %v853, %v859
        %v877 = vmul.f32 %v854, %v863
        %v878 = vmul.f32 %v855, %v861
        %891 = vrot.lane.b32.xlu0 %v867, 126
        %v892 = vpop.permute.xlu0 %891
        %893 = vrot.lane.b32.xlu0 %v868, 126
        %v894 = vpop.permute.xlu0 %893
        %895 = vrot.lane.b32.xlu0 %v869, 126
        %v896 = vpop.permute.xlu0 %895
        %897 = vrot.lane.b32.xlu0 %v870, 126
        %v898 = vpop.permute.xlu0 %897
        %899 = vrot.lane.b32.xlu0 %v871, 126
        %v900 = vpop.permute.xlu0 %899
        %901 = vrot.lane.b32.xlu0 %v872, 126
        %v902 = vpop.permute.xlu0 %901
        %903 = vrot.lane.b32.xlu0 %v873, 126
        %v904 = vpop.permute.xlu0 %903
        %905 = vrot.lane.b32.xlu0 %v874, 126
        %v906 = vpop.permute.xlu0 %905
        %907 = vrot.lane.b32.xlu0 %v875, 126
        %v908 = vpop.permute.xlu0 %907
        %909 = vrot.lane.b32.xlu0 %v876, 126
        %v910 = vpop.permute.xlu0 %909
        %911 = vrot.lane.b32.xlu0 %v877, 126
        %v912 = vpop.permute.xlu0 %911
        %913 = vrot.lane.b32.xlu0 %v878, 126
        %v914 = vpop.permute.xlu0 %913
        %vm915 = vcmask 1031168
        %v916 = vsel %vm915, %v892, %v894
        %v917 = vsel %vm915, %v894, %v896
        %v918 = vsel %vm915, %v898, %v900
        %v919 = vsel %vm915, %v900, %v902
        %v920 = vsel %vm915, %v904, %v906
        %v921 = vsel %vm915, %v906, %v908
        %v922 = vsel %vm915, %v910, %v912
        %v923 = vsel %vm915, %v912, %v914
        %932 = vst [vmem:[#allocation2 + $0x40] sm:$0xff] %v916
        %933 = vst [vmem:[#allocation2 + $0x48] sm:$0xff] %v917
        %934 = vst [vmem:[#allocation2 + $0x50] sm:$0xff] %v918
        %935 = vst [vmem:[#allocation2 + $0x58] sm:$0xff] %v919
        %936 = vst [vmem:[#allocation2 + $0x60] sm:$0xff] %v920
        %937 = vst [vmem:[#allocation2 + $0x68] sm:$0xff] %v921
        %938 = vst [vmem:[#allocation2 + $0x70] sm:$0xff] %v922
        %939 = vst [vmem:[#allocation2 + $0x78] sm:$0xff] %v923
        %v940 = vld [vmem:[%s210] sm:$0xff]
        %v941 = vld [vmem:[%s210 + $0x8] sm:$0xff]
        %v942 = vld [vmem:[%s210 + $0x10] sm:$0xff]
        %v943 = vld [vmem:[%s210 + $0x18] sm:$0xff]
        %v944 = vld [vmem:[%s210 + $0x20] sm:$0xff]
        %v945 = vld [vmem:[%s210 + $0x28] sm:$0xff]
        %v946 = vld [vmem:[%s210 + $0x30] sm:$0xff]
        %v947 = vld [vmem:[%s210 + $0x38] sm:$0xff]
        %v948 = vld [vmem:[%s210 + $0x40] sm:$0xff]
        %v949 = vld [vmem:[%s210 + $0x48] sm:$0xff]
        %v950 = vld [vmem:[%s210 + $0x50] sm:$0xff]
        %v951 = vld [vmem:[%s210 + $0x58] sm:$0xff]
        %964 = vrot.lane.b32.xlu0 %v940, 111
        %v965 = vpop.permute.xlu0 %964
        %966 = vrot.lane.b32.xlu0 %v941, 111
        %v967 = vpop.permute.xlu0 %966
        %968 = vrot.lane.b32.xlu0 %v942, 111
        %v969 = vpop.permute.xlu0 %968
        %970 = vrot.lane.b32.xlu0 %v943, 111
        %v971 = vpop.permute.xlu0 %970
        %972 = vrot.lane.b32.xlu0 %v944, 111
        %v973 = vpop.permute.xlu0 %972
        %974 = vrot.lane.b32.xlu0 %v945, 111
        %v975 = vpop.permute.xlu0 %974
        %976 = vrot.lane.b32.xlu0 %v946, 111
        %v977 = vpop.permute.xlu0 %976
        %978 = vrot.lane.b32.xlu0 %v947, 111
        %v979 = vpop.permute.xlu0 %978
        %980 = vrot.lane.b32.xlu0 %v948, 111
        %v981 = vpop.permute.xlu0 %980
        %982 = vrot.lane.b32.xlu0 %v949, 111
        %v983 = vpop.permute.xlu0 %982
        %984 = vrot.lane.b32.xlu0 %v950, 111
        %v985 = vpop.permute.xlu0 %984
        %986 = vrot.lane.b32.xlu0 %v951, 111
        %v987 = vpop.permute.xlu0 %986
        %v988 = vsel %vm538, %v965, %v967
        %v989 = vsel %vm538, %v967, %v969
        %v990 = vsel %vm538, %v971, %v973
        %v991 = vsel %vm538, %v973, %v975
        %v992 = vsel %vm538, %v977, %v979
        %v993 = vsel %vm538, %v979, %v981
        %v994 = vsel %vm538, %v983, %v985
        %v995 = vsel %vm538, %v985, %v987
        %1004 = vst [vmem:[#allocation2 + $0x80] sm:$0xff] %v988
        %1005 = vst [vmem:[#allocation2 + $0x88] sm:$0xff] %v989
        %1006 = vst [vmem:[#allocation2 + $0x90] sm:$0xff] %v990
        %1007 = vst [vmem:[#allocation2 + $0x98] sm:$0xff] %v991
        %1008 = vst [vmem:[#allocation2 + $0xa0] sm:$0xff] %v992
        %1009 = vst [vmem:[#allocation2 + $0xa8] sm:$0xff] %v993
        %1010 = vst [vmem:[#allocation2 + $0xb0] sm:$0xff] %v994
        %1011 = vst [vmem:[#allocation2 + $0xb8] sm:$0xff] %v995
        %v1012 = vld [vmem:[%s210] sm:$0xff]
        %v1013 = vld [vmem:[%s210 + $0x8] sm:$0xff]
        %v1014 = vld [vmem:[%s210 + $0x10] sm:$0xff]
        %v1015 = vld [vmem:[%s210 + $0x18] sm:$0xff]
        %v1016 = vld [vmem:[%s210 + $0x20] sm:$0xff]
        %v1017 = vld [vmem:[%s210 + $0x28] sm:$0xff]
        %v1018 = vld [vmem:[%s210 + $0x30] sm:$0xff]
        %v1019 = vld [vmem:[%s210 + $0x38] sm:$0xff]
        %v1020 = vld [vmem:[%s210 + $0x40] sm:$0xff]
        %v1021 = vld [vmem:[%s210 + $0x48] sm:$0xff]
        %v1022 = vld [vmem:[%s210 + $0x50] sm:$0xff]
        %v1023 = vld [vmem:[%s210 + $0x58] sm:$0xff]
        %1024 = vrot.lane.b32.xlu0 %v287, 18
        %v1025 = vpop.permute.xlu0 %1024
        %1026 = vrot.lane.b32.xlu0 %v288, 18
        %v1027 = vpop.permute.xlu0 %1026
        %vm1028 = vcmask 146432
        %v1029 = vsel %vm1028, %v1025, %v1027
        %v1033 = vmul.f32 %v1012, %v1025
        %v1034 = vmul.f32 %v1013, %v1029
        %v1035 = vmul.f32 %v1014, %v1027
        %v1036 = vmul.f32 %v1015, %v1025
        %v1037 = vmul.f32 %v1016, %v1029
        %v1038 = vmul.f32 %v1017, %v1027
        %v1039 = vmul.f32 %v1018, %v1025
        %v1040 = vmul.f32 %v1019, %v1029
        %v1041 = vmul.f32 %v1020, %v1027
        %v1042 = vmul.f32 %v1021, %v1025
        %v1043 = vmul.f32 %v1022, %v1029
        %v1044 = vmul.f32 %v1023, %v1027
        %1057 = vrot.lane.b32.xlu0 %v1033, 110
        %v1058 = vpop.permute.xlu0 %1057
        %1059 = vrot.lane.b32.xlu0 %v1034, 110
        %v1060 = vpop.permute.xlu0 %1059
        %1061 = vrot.lane.b32.xlu0 %v1035, 110
        %v1062 = vpop.permute.xlu0 %1061
        %1063 = vrot.lane.b32.xlu0 %v1036, 110
        %v1064 = vpop.permute.xlu0 %1063
        %1065 = vrot.lane.b32.xlu0 %v1037, 110
        %v1066 = vpop.permute.xlu0 %1065
        %1067 = vrot.lane.b32.xlu0 %v1038, 110
        %v1068 = vpop.permute.xlu0 %1067
        %1069 = vrot.lane.b32.xlu0 %v1039, 110
        %v1070 = vpop.permute.xlu0 %1069
        %1071 = vrot.lane.b32.xlu0 %v1040, 110
        %v1072 = vpop.permute.xlu0 %1071
        %1073 = vrot.lane.b32.xlu0 %v1041, 110
        %v1074 = vpop.permute.xlu0 %1073
        %1075 = vrot.lane.b32.xlu0 %v1042, 110
        %v1076 = vpop.permute.xlu0 %1075
        %1077 = vrot.lane.b32.xlu0 %v1043, 110
        %v1078 = vpop.permute.xlu0 %1077
        %1079 = vrot.lane.b32.xlu0 %v1044, 110
        %v1080 = vpop.permute.xlu0 %1079
        %vm1081 = vcmask 900096
        %v1082 = vsel %vm1081, %v1058, %v1060
        %v1083 = vsel %vm1081, %v1060, %v1062
        %v1084 = vsel %vm1081, %v1064, %v1066
        %v1085 = vsel %vm1081, %v1066, %v1068
        %v1086 = vsel %vm1081, %v1070, %v1072
        %v1087 = vsel %vm1081, %v1072, %v1074
        %v1088 = vsel %vm1081, %v1076, %v1078
        %v1089 = vsel %vm1081, %v1078, %v1080
        %1098 = vst [vmem:[#allocation2 + $0xc0] sm:$0xff] %v1082
        %1099 = vst [vmem:[#allocation2 + $0xc8] sm:$0xff] %v1083
        %1100 = vst [vmem:[#allocation2 + $0xd0] sm:$0xff] %v1084
        %1101 = vst [vmem:[#allocation2 + $0xd8] sm:$0xff] %v1085
        %1102 = vst [vmem:[#allocation2 + $0xe0] sm:$0xff] %v1086
        %1103 = vst [vmem:[#allocation2 + $0xe8] sm:$0xff] %v1087
        %1104 = vst [vmem:[#allocation2 + $0xf0] sm:$0xff] %v1088
        %1105 = vst [vmem:[#allocation2 + $0xf8] sm:$0xff] %v1089
        %s1106 = scalar_lea.vmem [#allocation6], 64
        %v1107 = vld [vmem:[%s1106] sm:$0xff]
        %v1108 = vld [vmem:[%s1106 + $0x8] sm:$0xff]
        %v1109 = vld [vmem:[%s1106 + $0x10] sm:$0xff]
        %v1110 = vld [vmem:[%s1106 + $0x18] sm:$0xff]
        %v1111 = vld [vmem:[%s1106 + $0x20] sm:$0xff]
        %v1112 = vld [vmem:[%s1106 + $0x28] sm:$0xff]
        %v1113 = vld [vmem:[%s1106 + $0x30] sm:$0xff]
        %v1114 = vld [vmem:[%s1106 + $0x38] sm:$0xff]
        %v1115 = vld [vmem:[#allocation2] sm:$0xff]
        %v1116 = vld [vmem:[#allocation2 + $0x8] sm:$0xff]
        %v1117 = vld [vmem:[#allocation2 + $0x10] sm:$0xff]
        %v1118 = vld [vmem:[#allocation2 + $0x18] sm:$0xff]
        %v1119 = vld [vmem:[#allocation2 + $0x20] sm:$0xff]
        %v1120 = vld [vmem:[#allocation2 + $0x28] sm:$0xff]
        %v1121 = vld [vmem:[#allocation2 + $0x30] sm:$0xff]
        %v1122 = vld [vmem:[#allocation2 + $0x38] sm:$0xff]
        %v1123 = vld [vmem:[#allocation2 + $0x40] sm:$0xff]
        %v1124 = vld [vmem:[#allocation2 + $0x48] sm:$0xff]
        %v1125 = vld [vmem:[#allocation2 + $0x50] sm:$0xff]
        %v1126 = vld [vmem:[#allocation2 + $0x58] sm:$0xff]
        %v1127 = vld [vmem:[#allocation2 + $0x60] sm:$0xff]
        %v1128 = vld [vmem:[#allocation2 + $0x68] sm:$0xff]
        %v1129 = vld [vmem:[#allocation2 + $0x70] sm:$0xff]
        %v1130 = vld [vmem:[#allocation2 + $0x78] sm:$0xff]
        %v1131 = vld [vmem:[#allocation2 + $0x80] sm:$0xff]
        %v1132 = vld [vmem:[#allocation2 + $0x88] sm:$0xff]
        %v1133 = vld [vmem:[#allocation2 + $0x90] sm:$0xff]
        %v1134 = vld [vmem:[#allocation2 + $0x98] sm:$0xff]
        %v1135 = vld [vmem:[#allocation2 + $0xa0] sm:$0xff]
        %v1136 = vld [vmem:[#allocation2 + $0xa8] sm:$0xff]
        %v1137 = vld [vmem:[#allocation2 + $0xb0] sm:$0xff]
        %v1138 = vld [vmem:[#allocation2 + $0xb8] sm:$0xff]
        %v1139 = vld [vmem:[#allocation2 + $0xc0] sm:$0xff]
        %v1140 = vld [vmem:[#allocation2 + $0xc8] sm:$0xff]
        %v1141 = vld [vmem:[#allocation2 + $0xd0] sm:$0xff]
        %v1142 = vld [vmem:[#allocation2 + $0xd8] sm:$0xff]
        %v1143 = vld [vmem:[#allocation2 + $0xe0] sm:$0xff]
        %v1144 = vld [vmem:[#allocation2 + $0xe8] sm:$0xff]
        %v1145 = vld [vmem:[#allocation2 + $0xf0] sm:$0xff]
        %v1146 = vld [vmem:[#allocation2 + $0xf8] sm:$0xff]
        %1147 = vmatprep.subr.mxu0 %v1146
        %1148 = vmatpush1.msra.mxu0 %v1145
        %1149 = vmatprep.subr.mxu0 %v1144
        %1150 = vmatpush1.msra.mxu0 %v1143
        %1151 = vmatprep.subr.mxu0 %v1142
        %1152 = vmatpush1.msra.mxu0 %v1141
        %1153 = vmatprep.subr.mxu0 %v1140
        %1154 = vmatpush1.msra.mxu0 %v1139
        %1155 = vmatprep.subr.mxu0 %v1138
        %1156 = vmatpush1.msra.mxu0 %v1137
        %1157 = vmatprep.subr.mxu0 %v1136
        %1158 = vmatpush1.msra.mxu0 %v1135
        %1159 = vmatprep.subr.mxu0 %v1134
        %1160 = vmatpush1.msra.mxu0 %v1133
        %1161 = vmatprep.subr.mxu0 %v1132
        %1162 = vmatpush1.msra.mxu0 %v1131
        %1163 = vmatprep.subr.mxu0 %v1130
        %1164 = vmatpush1.msra.mxu0 %v1129
        %1165 = vmatprep.subr.mxu0 %v1128
        %1166 = vmatpush1.msra.mxu0 %v1127
        %1167 = vmatprep.subr.mxu0 %v1126
        %1168 = vmatpush1.msra.mxu0 %v1125
        %1169 = vmatprep.subr.mxu0 %v1124
        %1170 = vmatpush1.msra.mxu0 %v1123
        %1171 = vmatprep.subr.mxu0 %v1122
        %1172 = vmatpush1.msra.mxu0 %v1121
        %1173 = vmatprep.subr.mxu0 %v1120
        %1174 = vmatpush1.msra.mxu0 %v1119
        %1175 = vmatprep.subr.mxu0 %v1118
        %1176 = vmatpush1.msra.mxu0 %v1117
        %1177 = vmatprep.subr.mxu0 %v1116
        %1178 = vmatpush1.msra.mxu0 %v1115
        %1179 = vmatprep.subr.mxu0 0.0
        %1180 = vmatpush2.msra.mxu0 0.0
        %1181 = vmatprep.subr.mxu0 0.0
        %1182 = vmatpush2.msra.mxu0 0.0
        %1183 = vmatprep.subr.mxu0 0.0
        %1184 = vmatpush2.msra.mxu0 0.0
        %1185 = vmatprep.subr.mxu0 0.0
        %1186 = vmatpush2.msra.mxu0 0.0
        %1187 = vmatprep.subr.mxu0 0.0
        %1188 = vmatpush2.msra.mxu0 0.0
        %1189 = vmatprep.subr.mxu0 0.0
        %1190 = vmatpush2.msra.mxu0 0.0
        %1191 = vmatprep.subr.mxu0 0.0
        %1192 = vmatpush2.msra.mxu0 0.0
        %1193 = vmatprep.subr.mxu0 0.0
        %1194 = vmatpush2.msra.mxu0 0.0
        %1195 = vmatprep.subr.mxu0 0.0
        %1196 = vmatpush2.msra.mxu0 0.0
        %1197 = vmatprep.subr.mxu0 0.0
        %1198 = vmatpush2.msra.mxu0 0.0
        %1199 = vmatprep.subr.mxu0 0.0
        %1200 = vmatpush2.msra.mxu0 0.0
        %1201 = vmatprep.subr.mxu0 0.0
        %1202 = vmatpush2.msra.mxu0 0.0
        %1203 = vmatprep.subr.mxu0 0.0
        %1204 = vmatpush2.msra.mxu0 0.0
        %1205 = vmatprep.subr.mxu0 0.0
        %1206 = vmatpush2.msra.mxu0 0.0
        %1207 = vmatprep.subr.mxu0 0.0
        %1208 = vmatpush2.msra.mxu0 0.0
        %1209 = vmatprep.subr.mxu0 0.0
        %1210 = vmatpush2.msra.mxu0 0.0
        %1211 = vmatprep.mubr.f32.mxu0 0.0
        %1212 = vmatmul.mubr.f32.gmra.mxu0 %v1107
        %v1213 = vpop.f32.mrf.mxu0
        %v1214 = vadd.f32 %v606, %v1213
        %v1215 = vpop.f32.mrf.mxu0
        %v1216 = vadd.f32 %v606, %v1215
        %1217 = vmatprep.mubr.f32.mxu0 0.0
        %1218 = vmatmul.mubr.f32.gmra.mxu0 %v1108
        %v1219 = vpop.f32.mrf.mxu0
        %v1220 = vadd.f32 %v611, %v1219
        %v1221 = vpop.f32.mrf.mxu0
        %v1222 = vadd.f32 %v611, %v1221
        %1223 = vmatprep.mubr.f32.mxu0 0.0
        %1224 = vmatmul.mubr.f32.gmra.mxu0 %v1109
        %v1225 = vpop.f32.mrf.mxu0
        %v1226 = vadd.f32 %v616, %v1225
        %v1227 = vpop.f32.mrf.mxu0
        %v1228 = vadd.f32 %v616, %v1227
        %1229 = vmatprep.mubr.f32.mxu0 0.0
        %1230 = vmatmul.mubr.f32.gmra.mxu0 %v1110
        %v1231 = vpop.f32.mrf.mxu0
        %v1232 = vadd.f32 %v621, %v1231
        %v1233 = vpop.f32.mrf.mxu0
        %v1234 = vadd.f32 %v621, %v1233
        %1235 = vmatprep.mubr.f32.mxu0 0.0
        %1236 = vmatmul.mubr.f32.gmra.mxu0 %v1111
        %v1237 = vpop.f32.mrf.mxu0
        %v1238 = vadd.f32 %v626, %v1237
        %v1239 = vpop.f32.mrf.mxu0
        %v1240 = vadd.f32 %v626, %v1239
        %1241 = vmatprep.mubr.f32.mxu0 0.0
        %1242 = vmatmul.mubr.f32.gmra.mxu0 %v1112
        %v1243 = vpop.f32.mrf.mxu0
        %v1244 = vadd.f32 %v631, %v1243
        %v1245 = vpop.f32.mrf.mxu0
        %v1246 = vadd.f32 %v631, %v1245
        %1247 = vmatprep.mubr.f32.mxu0 0.0
        %1248 = vmatmul.mubr.f32.gmra.mxu0 %v1113
        %v1249 = vpop.f32.mrf.mxu0
        %v1250 = vadd.f32 %v636, %v1249
        %v1251 = vpop.f32.mrf.mxu0
        %v1252 = vadd.f32 %v636, %v1251
        %1253 = vmatprep.mubr.f32.mxu0 0.0
        %1254 = vmatmul.mubr.f32.gmra.mxu0 %v1114
        %v1255 = vpop.f32.mrf.mxu0
        %v1256 = vadd.f32 %v641, %v1255
        %v1257 = vpop.f32.mrf.mxu0
        %v1258 = vadd.f32 %v641, %v1257
        %1259 = vdwg.mxu0
        %s1260 = scalar_lea.vmem %s241, 128 [#allocation8]
        %1261 = vst [vmem:[%s1260] sm:$0xff] %v1214
        %1262 = vst [vmem:[%s1260 + $0x8] sm:$0xff] %v1216
        %1263 = vst [vmem:[%s1260 + $0x10] sm:$0xff] %v1220
        %1264 = vst [vmem:[%s1260 + $0x18] sm:$0xff] %v1222
        %1265 = vst [vmem:[%s1260 + $0x20] sm:$0xff] %v1226
        %1266 = vst [vmem:[%s1260 + $0x28] sm:$0xff] %v1228
        %1267 = vst [vmem:[%s1260 + $0x30] sm:$0xff] %v1232
        %1268 = vst [vmem:[%s1260 + $0x38] sm:$0xff] %v1234
        %1269 = vst [vmem:[%s1260 + $0x40] sm:$0xff] %v1238
        %1270 = vst [vmem:[%s1260 + $0x48] sm:$0xff] %v1240
        %1271 = vst [vmem:[%s1260 + $0x50] sm:$0xff] %v1244
        %1272 = vst [vmem:[%s1260 + $0x58] sm:$0xff] %v1246
        %1273 = vst [vmem:[%s1260 + $0x60] sm:$0xff] %v1250
        %1274 = vst [vmem:[%s1260 + $0x68] sm:$0xff] %v1252
        %1275 = vst [vmem:[%s1260 + $0x70] sm:$0xff] %v1256
        %1276 = vst [vmem:[%s1260 + $0x78] sm:$0xff] %v1258
        %v1277 = vld [vmem:[%s210] sm:$0xff]
        %v1278 = vld [vmem:[%s210 + $0x8] sm:$0xff]
        %v1279 = vld [vmem:[%s210 + $0x10] sm:$0xff]
        %v1280 = vld [vmem:[%s210 + $0x18] sm:$0xff]
        %v1281 = vld [vmem:[%s210 + $0x20] sm:$0xff]
        %v1282 = vld [vmem:[%s210 + $0x28] sm:$0xff]
        %v1283 = vld [vmem:[%s210 + $0x30] sm:$0xff]
        %v1284 = vld [vmem:[%s210 + $0x38] sm:$0xff]
        %v1285 = vld [vmem:[%s210 + $0x40] sm:$0xff]
        %v1286 = vld [vmem:[%s210 + $0x48] sm:$0xff]
        %v1287 = vld [vmem:[%s210 + $0x50] sm:$0xff]
        %v1288 = vld [vmem:[%s210 + $0x58] sm:$0xff]
        %v1289 = vmul.f32 %v1277, %v409
        %v1290 = vmul.f32 %v1278, %v413
        %v1291 = vmul.f32 %v1279, %v411
        %v1292 = vmul.f32 %v1280, %v409
        %v1293 = vmul.f32 %v1281, %v413
        %v1294 = vmul.f32 %v1282, %v411
        %v1295 = vmul.f32 %v1283, %v409
        %v1296 = vmul.f32 %v1284, %v413
        %v1297 = vmul.f32 %v1285, %v411
        %v1298 = vmul.f32 %v1286, %v409
        %v1299 = vmul.f32 %v1287, %v413
        %v1300 = vmul.f32 %v1288, %v411
        %1313 = vrot.lane.b32.xlu0 %v1289, 112
        %v1314 = vpop.permute.xlu0 %1313
        %1315 = vrot.lane.b32.xlu0 %v1290, 112
        %v1316 = vpop.permute.xlu0 %1315
        %1317 = vrot.lane.b32.xlu0 %v1291, 112
        %v1318 = vpop.permute.xlu0 %1317
        %1319 = vrot.lane.b32.xlu0 %v1292, 112
        %v1320 = vpop.permute.xlu0 %1319
        %1321 = vrot.lane.b32.xlu0 %v1293, 112
        %v1322 = vpop.permute.xlu0 %1321
        %1323 = vrot.lane.b32.xlu0 %v1294, 112
        %v1324 = vpop.permute.xlu0 %1323
        %1325 = vrot.lane.b32.xlu0 %v1295, 112
        %v1326 = vpop.permute.xlu0 %1325
        %1327 = vrot.lane.b32.xlu0 %v1296, 112
        %v1328 = vpop.permute.xlu0 %1327
        %1329 = vrot.lane.b32.xlu0 %v1297, 112
        %v1330 = vpop.permute.xlu0 %1329
        %1331 = vrot.lane.b32.xlu0 %v1298, 112
        %v1332 = vpop.permute.xlu0 %1331
        %1333 = vrot.lane.b32.xlu0 %v1299, 112
        %v1334 = vpop.permute.xlu0 %1333
        %1335 = vrot.lane.b32.xlu0 %v1300, 112
        %v1336 = vpop.permute.xlu0 %1335
        %v1337 = vsel %vm465, %v1314, %v1316
        %v1338 = vsel %vm465, %v1316, %v1318
        %v1339 = vsel %vm465, %v1320, %v1322
        %v1340 = vsel %vm465, %v1322, %v1324
        %v1341 = vsel %vm465, %v1326, %v1328
        %v1342 = vsel %vm465, %v1328, %v1330
        %v1343 = vsel %vm465, %v1332, %v1334
        %v1344 = vsel %vm465, %v1334, %v1336
        %1353 = vst [vmem:[#allocation2] sm:$0xff] %v1337
        %1354 = vst [vmem:[#allocation2 + $0x8] sm:$0xff] %v1338
        %1355 = vst [vmem:[#allocation2 + $0x10] sm:$0xff] %v1339
        %1356 = vst [vmem:[#allocation2 + $0x18] sm:$0xff] %v1340
        %1357 = vst [vmem:[#allocation2 + $0x20] sm:$0xff] %v1341
        %1358 = vst [vmem:[#allocation2 + $0x28] sm:$0xff] %v1342
        %1359 = vst [vmem:[#allocation2 + $0x30] sm:$0xff] %v1343
        %1360 = vst [vmem:[#allocation2 + $0x38] sm:$0xff] %v1344
        %v1361 = vld [vmem:[%s210] sm:$0xff]
        %v1362 = vld [vmem:[%s210 + $0x8] sm:$0xff]
        %v1363 = vld [vmem:[%s210 + $0x10] sm:$0xff]
        %v1364 = vld [vmem:[%s210 + $0x18] sm:$0xff]
        %v1365 = vld [vmem:[%s210 + $0x20] sm:$0xff]
        %v1366 = vld [vmem:[%s210 + $0x28] sm:$0xff]
        %v1367 = vld [vmem:[%s210 + $0x30] sm:$0xff]
        %v1368 = vld [vmem:[%s210 + $0x38] sm:$0xff]
        %v1369 = vld [vmem:[%s210 + $0x40] sm:$0xff]
        %v1370 = vld [vmem:[%s210 + $0x48] sm:$0xff]
        %v1371 = vld [vmem:[%s210 + $0x50] sm:$0xff]
        %v1372 = vld [vmem:[%s210 + $0x58] sm:$0xff]
        %1385 = vrot.lane.b32.xlu0 %v1361, 111
        %v1386 = vpop.permute.xlu0 %1385
        %1387 = vrot.lane.b32.xlu0 %v1362, 111
        %v1388 = vpop.permute.xlu0 %1387
        %1389 = vrot.lane.b32.xlu0 %v1363, 111
        %v1390 = vpop.permute.xlu0 %1389
        %1391 = vrot.lane.b32.xlu0 %v1364, 111
        %v1392 = vpop.permute.xlu0 %1391
        %1393 = vrot.lane.b32.xlu0 %v1365, 111
        %v1394 = vpop.permute.xlu0 %1393
        %1395 = vrot.lane.b32.xlu0 %v1366, 111
        %v1396 = vpop.permute.xlu0 %1395
        %1397 = vrot.lane.b32.xlu0 %v1367, 111
        %v1398 = vpop.permute.xlu0 %1397
        %1399 = vrot.lane.b32.xlu0 %v1368, 111
        %v1400 = vpop.permute.xlu0 %1399
        %1401 = vrot.lane.b32.xlu0 %v1369, 111
        %v1402 = vpop.permute.xlu0 %1401
        %1403 = vrot.lane.b32.xlu0 %v1370, 111
        %v1404 = vpop.permute.xlu0 %1403
        %1405 = vrot.lane.b32.xlu0 %v1371, 111
        %v1406 = vpop.permute.xlu0 %1405
        %1407 = vrot.lane.b32.xlu0 %v1372, 111
        %v1408 = vpop.permute.xlu0 %1407
        %v1409 = vsel %vm538, %v1386, %v1388
        %v1410 = vsel %vm538, %v1388, %v1390
        %v1411 = vsel %vm538, %v1392, %v1394
        %v1412 = vsel %vm538, %v1394, %v1396
        %v1413 = vsel %vm538, %v1398, %v1400
        %v1414 = vsel %vm538, %v1400, %v1402
        %v1415 = vsel %vm538, %v1404, %v1406
        %v1416 = vsel %vm538, %v1406, %v1408
        %1425 = vst [vmem:[#allocation2 + $0x40] sm:$0xff] %v1409
        %1426 = vst [vmem:[#allocation2 + $0x48] sm:$0xff] %v1410
        %1427 = vst [vmem:[#allocation2 + $0x50] sm:$0xff] %v1411
        %1428 = vst [vmem:[#allocation2 + $0x58] sm:$0xff] %v1412
        %1429 = vst [vmem:[#allocation2 + $0x60] sm:$0xff] %v1413
        %1430 = vst [vmem:[#allocation2 + $0x68] sm:$0xff] %v1414
        %1431 = vst [vmem:[#allocation2 + $0x70] sm:$0xff] %v1415
        %1432 = vst [vmem:[#allocation2 + $0x78] sm:$0xff] %v1416
        %v1433 = vld [vmem:[%s210] sm:$0xff]
        %v1434 = vld [vmem:[%s210 + $0x8] sm:$0xff]
        %v1435 = vld [vmem:[%s210 + $0x10] sm:$0xff]
        %v1436 = vld [vmem:[%s210 + $0x18] sm:$0xff]
        %v1437 = vld [vmem:[%s210 + $0x20] sm:$0xff]
        %v1438 = vld [vmem:[%s210 + $0x28] sm:$0xff]
        %v1439 = vld [vmem:[%s210 + $0x30] sm:$0xff]
        %v1440 = vld [vmem:[%s210 + $0x38] sm:$0xff]
        %v1441 = vld [vmem:[%s210 + $0x40] sm:$0xff]
        %v1442 = vld [vmem:[%s210 + $0x48] sm:$0xff]
        %v1443 = vld [vmem:[%s210 + $0x50] sm:$0xff]
        %v1444 = vld [vmem:[%s210 + $0x58] sm:$0xff]
        %1445 = vrot.lane.b32.xlu0 %v281, 32
        %v1446 = vpop.permute.xlu0 %1445
        %1447 = vrot.lane.b32.xlu0 %v282, 32
        %v1448 = vpop.permute.xlu0 %1447
        %vm1449 = vcmask 261120
        %v1450 = vsel %vm1449, %v1446, %v1448
        %v1454 = vmul.f32 %v1433, %v1446
        %v1455 = vmul.f32 %v1434, %v1450
        %v1456 = vmul.f32 %v1435, %v1448
        %v1457 = vmul.f32 %v1436, %v1446
        %v1458 = vmul.f32 %v1437, %v1450
        %v1459 = vmul.f32 %v1438, %v1448
        %v1460 = vmul.f32 %v1439, %v1446
        %v1461 = vmul.f32 %v1440, %v1450
        %v1462 = vmul.f32 %v1441, %v1448
        %v1463 = vmul.f32 %v1442, %v1446
        %v1464 = vmul.f32 %v1443, %v1450
        %v1465 = vmul.f32 %v1444, %v1448
        %1478 = vrot.lane.b32.xlu0 %v1454, 96
        %v1479 = vpop.permute.xlu0 %1478
        %1480 = vrot.lane.b32.xlu0 %v1455, 96
        %v1481 = vpop.permute.xlu0 %1480
        %1482 = vrot.lane.b32.xlu0 %v1456, 96
        %v1483 = vpop.permute.xlu0 %1482
        %1484 = vrot.lane.b32.xlu0 %v1457, 96
        %v1485 = vpop.permute.xlu0 %1484
        %1486 = vrot.lane.b32.xlu0 %v1458, 96
        %v1487 = vpop.permute.xlu0 %1486
        %1488 = vrot.lane.b32.xlu0 %v1459, 96
        %v1489 = vpop.permute.xlu0 %1488
        %1490 = vrot.lane.b32.xlu0 %v1460, 96
        %v1491 = vpop.permute.xlu0 %1490
        %1492 = vrot.lane.b32.xlu0 %v1461, 96
        %v1493 = vpop.permute.xlu0 %1492
        %1494 = vrot.lane.b32.xlu0 %v1462, 96
        %v1495 = vpop.permute.xlu0 %1494
        %1496 = vrot.lane.b32.xlu0 %v1463, 96
        %v1497 = vpop.permute.xlu0 %1496
        %1498 = vrot.lane.b32.xlu0 %v1464, 96
        %v1499 = vpop.permute.xlu0 %1498
        %1500 = vrot.lane.b32.xlu0 %v1465, 96
        %v1501 = vpop.permute.xlu0 %1500
        %vm1502 = vcmask 785408
        %v1503 = vsel %vm1502, %v1479, %v1481
        %v1504 = vsel %vm1502, %v1481, %v1483
        %v1505 = vsel %vm1502, %v1485, %v1487
        %v1506 = vsel %vm1502, %v1487, %v1489
        %v1507 = vsel %vm1502, %v1491, %v1493
        %v1508 = vsel %vm1502, %v1493, %v1495
        %v1509 = vsel %vm1502, %v1497, %v1499
        %v1510 = vsel %vm1502, %v1499, %v1501
        %1519 = vst [vmem:[#allocation2 + $0x80] sm:$0xff] %v1503
        %1520 = vst [vmem:[#allocation2 + $0x88] sm:$0xff] %v1504
        %1521 = vst [vmem:[#allocation2 + $0x90] sm:$0xff] %v1505
        %1522 = vst [vmem:[#allocation2 + $0x98] sm:$0xff] %v1506
        %1523 = vst [vmem:[#allocation2 + $0xa0] sm:$0xff] %v1507
        %1524 = vst [vmem:[#allocation2 + $0xa8] sm:$0xff] %v1508
        %1525 = vst [vmem:[#allocation2 + $0xb0] sm:$0xff] %v1509
        %1526 = vst [vmem:[#allocation2 + $0xb8] sm:$0xff] %v1510
        %v1527 = vld [vmem:[%s210] sm:$0xff]
        %v1528 = vld [vmem:[%s210 + $0x8] sm:$0xff]
        %v1529 = vld [vmem:[%s210 + $0x10] sm:$0xff]
        %v1530 = vld [vmem:[%s210 + $0x18] sm:$0xff]
        %v1531 = vld [vmem:[%s210 + $0x20] sm:$0xff]
        %v1532 = vld [vmem:[%s210 + $0x28] sm:$0xff]
        %v1533 = vld [vmem:[%s210 + $0x30] sm:$0xff]
        %v1534 = vld [vmem:[%s210 + $0x38] sm:$0xff]
        %v1535 = vld [vmem:[%s210 + $0x40] sm:$0xff]
        %v1536 = vld [vmem:[%s210 + $0x48] sm:$0xff]
        %v1537 = vld [vmem:[%s210 + $0x50] sm:$0xff]
        %v1538 = vld [vmem:[%s210 + $0x58] sm:$0xff]
        %1551 = vrot.lane.b32.xlu0 %v1527, 95
        %v1552 = vpop.permute.xlu0 %1551
        %1553 = vrot.lane.b32.xlu0 %v1528, 95
        %v1554 = vpop.permute.xlu0 %1553
        %1555 = vrot.lane.b32.xlu0 %v1529, 95
        %v1556 = vpop.permute.xlu0 %1555
        %1557 = vrot.lane.b32.xlu0 %v1530, 95
        %v1558 = vpop.permute.xlu0 %1557
        %1559 = vrot.lane.b32.xlu0 %v1531, 95
        %v1560 = vpop.permute.xlu0 %1559
        %1561 = vrot.lane.b32.xlu0 %v1532, 95
        %v1562 = vpop.permute.xlu0 %1561
        %1563 = vrot.lane.b32.xlu0 %v1533, 95
        %v1564 = vpop.permute.xlu0 %1563
        %1565 = vrot.lane.b32.xlu0 %v1534, 95
        %v1566 = vpop.permute.xlu0 %1565
        %1567 = vrot.lane.b32.xlu0 %v1535, 95
        %v1568 = vpop.permute.xlu0 %1567
        %1569 = vrot.lane.b32.xlu0 %v1536, 95
        %v1570 = vpop.permute.xlu0 %1569
        %1571 = vrot.lane.b32.xlu0 %v1537, 95
        %v1572 = vpop.permute.xlu0 %1571
        %1573 = vrot.lane.b32.xlu0 %v1538, 95
        %v1574 = vpop.permute.xlu0 %1573
        %vm1575 = vcmask 777216
        %v1576 = vsel %vm1575, %v1552, %v1554
        %v1577 = vsel %vm1575, %v1554, %v1556
        %v1578 = vsel %vm1575, %v1558, %v1560
        %v1579 = vsel %vm1575, %v1560, %v1562
        %v1580 = vsel %vm1575, %v1564, %v1566
        %v1581 = vsel %vm1575, %v1566, %v1568
        %v1582 = vsel %vm1575, %v1570, %v1572
        %v1583 = vsel %vm1575, %v1572, %v1574
        %1592 = vst [vmem:[#allocation2 + $0xc0] sm:$0xff] %v1576
        %1593 = vst [vmem:[#allocation2 + $0xc8] sm:$0xff] %v1577
        %1594 = vst [vmem:[#allocation2 + $0xd0] sm:$0xff] %v1578
        %1595 = vst [vmem:[#allocation2 + $0xd8] sm:$0xff] %v1579
        %1596 = vst [vmem:[#allocation2 + $0xe0] sm:$0xff] %v1580
        %1597 = vst [vmem:[#allocation2 + $0xe8] sm:$0xff] %v1581
        %1598 = vst [vmem:[#allocation2 + $0xf0] sm:$0xff] %v1582
        %1599 = vst [vmem:[#allocation2 + $0xf8] sm:$0xff] %v1583
        %s1600 = scalar_lea.vmem [#allocation6], 128
        %v1601 = vld [vmem:[%s1600] sm:$0xff]
        %v1602 = vld [vmem:[%s1600 + $0x8] sm:$0xff]
        %v1603 = vld [vmem:[%s1600 + $0x10] sm:$0xff]
        %v1604 = vld [vmem:[%s1600 + $0x18] sm:$0xff]
        %v1605 = vld [vmem:[%s1600 + $0x20] sm:$0xff]
        %v1606 = vld [vmem:[%s1600 + $0x28] sm:$0xff]
        %v1607 = vld [vmem:[%s1600 + $0x30] sm:$0xff]
        %v1608 = vld [vmem:[%s1600 + $0x38] sm:$0xff]
        %v1609 = vld [vmem:[#allocation2] sm:$0xff]
        %v1610 = vld [vmem:[#allocation2 + $0x8] sm:$0xff]
        %v1611 = vld [vmem:[#allocation2 + $0x10] sm:$0xff]
        %v1612 = vld [vmem:[#allocation2 + $0x18] sm:$0xff]
        %v1613 = vld [vmem:[#allocation2 + $0x20] sm:$0xff]
        %v1614 = vld [vmem:[#allocation2 + $0x28] sm:$0xff]
        %v1615 = vld [vmem:[#allocation2 + $0x30] sm:$0xff]
        %v1616 = vld [vmem:[#allocation2 + $0x38] sm:$0xff]
        %v1617 = vld [vmem:[#allocation2 + $0x40] sm:$0xff]
        %v1618 = vld [vmem:[#allocation2 + $0x48] sm:$0xff]
        %v1619 = vld [vmem:[#allocation2 + $0x50] sm:$0xff]
        %v1620 = vld [vmem:[#allocation2 + $0x58] sm:$0xff]
        %v1621 = vld [vmem:[#allocation2 + $0x60] sm:$0xff]
        %v1622 = vld [vmem:[#allocation2 + $0x68] sm:$0xff]
        %v1623 = vld [vmem:[#allocation2 + $0x70] sm:$0xff]
        %v1624 = vld [vmem:[#allocation2 + $0x78] sm:$0xff]
        %v1625 = vld [vmem:[#allocation2 + $0x80] sm:$0xff]
        %v1626 = vld [vmem:[#allocation2 + $0x88] sm:$0xff]
        %v1627 = vld [vmem:[#allocation2 + $0x90] sm:$0xff]
        %v1628 = vld [vmem:[#allocation2 + $0x98] sm:$0xff]
        %v1629 = vld [vmem:[#allocation2 + $0xa0] sm:$0xff]
        %v1630 = vld [vmem:[#allocation2 + $0xa8] sm:$0xff]
        %v1631 = vld [vmem:[#allocation2 + $0xb0] sm:$0xff]
        %v1632 = vld [vmem:[#allocation2 + $0xb8] sm:$0xff]
        %v1633 = vld [vmem:[#allocation2 + $0xc0] sm:$0xff]
        %v1634 = vld [vmem:[#allocation2 + $0xc8] sm:$0xff]
        %v1635 = vld [vmem:[#allocation2 + $0xd0] sm:$0xff]
        %v1636 = vld [vmem:[#allocation2 + $0xd8] sm:$0xff]
        %v1637 = vld [vmem:[#allocation2 + $0xe0] sm:$0xff]
        %v1638 = vld [vmem:[#allocation2 + $0xe8] sm:$0xff]
        %v1639 = vld [vmem:[#allocation2 + $0xf0] sm:$0xff]
        %v1640 = vld [vmem:[#allocation2 + $0xf8] sm:$0xff]
        %1641 = vmatprep.subr.mxu0 %v1640
        %1642 = vmatpush1.msra.mxu0 %v1639
        %1643 = vmatprep.subr.mxu0 %v1638
        %1644 = vmatpush1.msra.mxu0 %v1637
        %1645 = vmatprep.subr.mxu0 %v1636
        %1646 = vmatpush1.msra.mxu0 %v1635
        %1647 = vmatprep.subr.mxu0 %v1634
        %1648 = vmatpush1.msra.mxu0 %v1633
        %1649 = vmatprep.subr.mxu0 %v1632
        %1650 = vmatpush1.msra.mxu0 %v1631
        %1651 = vmatprep.subr.mxu0 %v1630
        %1652 = vmatpush1.msra.mxu0 %v1629
        %1653 = vmatprep.subr.mxu0 %v1628
        %1654 = vmatpush1.msra.mxu0 %v1627
        %1655 = vmatprep.subr.mxu0 %v1626
        %1656 = vmatpush1.msra.mxu0 %v1625
        %1657 = vmatprep.subr.mxu0 %v1624
        %1658 = vmatpush1.msra.mxu0 %v1623
        %1659 = vmatprep.subr.mxu0 %v1622
        %1660 = vmatpush1.msra.mxu0 %v1621
        %1661 = vmatprep.subr.mxu0 %v1620
        %1662 = vmatpush1.msra.mxu0 %v1619
        %1663 = vmatprep.subr.mxu0 %v1618
        %1664 = vmatpush1.msra.mxu0 %v1617
        %1665 = vmatprep.subr.mxu0 %v1616
        %1666 = vmatpush1.msra.mxu0 %v1615
        %1667 = vmatprep.subr.mxu0 %v1614
        %1668 = vmatpush1.msra.mxu0 %v1613
        %1669 = vmatprep.subr.mxu0 %v1612
        %1670 = vmatpush1.msra.mxu0 %v1611
        %1671 = vmatprep.subr.mxu0 %v1610
        %1672 = vmatpush1.msra.mxu0 %v1609
        %1673 = vmatprep.subr.mxu0 0.0
        %1674 = vmatpush2.msra.mxu0 0.0
        %1675 = vmatprep.subr.mxu0 0.0
        %1676 = vmatpush2.msra.mxu0 0.0
        %1677 = vmatprep.subr.mxu0 0.0
        %1678 = vmatpush2.msra.mxu0 0.0
        %1679 = vmatprep.subr.mxu0 0.0
        %1680 = vmatpush2.msra.mxu0 0.0
        %1681 = vmatprep.subr.mxu0 0.0
        %1682 = vmatpush2.msra.mxu0 0.0
        %1683 = vmatprep.subr.mxu0 0.0
        %1684 = vmatpush2.msra.mxu0 0.0
        %1685 = vmatprep.subr.mxu0 0.0
        %1686 = vmatpush2.msra.mxu0 0.0
        %1687 = vmatprep.subr.mxu0 0.0
        %1688 = vmatpush2.msra.mxu0 0.0
        %1689 = vmatprep.subr.mxu0 0.0
        %1690 = vmatpush2.msra.mxu0 0.0
        %1691 = vmatprep.subr.mxu0 0.0
        %1692 = vmatpush2.msra.mxu0 0.0
        %1693 = vmatprep.subr.mxu0 0.0
        %1694 = vmatpush2.msra.mxu0 0.0
        %1695 = vmatprep.subr.mxu0 0.0
        %1696 = vmatpush2.msra.mxu0 0.0
        %1697 = vmatprep.subr.mxu0 0.0
        %1698 = vmatpush2.msra.mxu0 0.0
        %1699 = vmatprep.subr.mxu0 0.0
        %1700 = vmatpush2.msra.mxu0 0.0
        %1701 = vmatprep.subr.mxu0 0.0
        %1702 = vmatpush2.msra.mxu0 0.0
        %1703 = vmatprep.subr.mxu0 0.0
        %1704 = vmatpush2.msra.mxu0 0.0
        %1705 = vmatprep.mubr.f32.mxu0 0.0
        %1706 = vmatmul.mubr.f32.gmra.mxu0 %v1601
        %v1707 = vpop.f32.mrf.mxu0
        %v1708 = vadd.f32 %v606, %v1707
        %v1709 = vpop.f32.mrf.mxu0
        %v1710 = vadd.f32 %v606, %v1709
        %1711 = vmatprep.mubr.f32.mxu0 0.0
        %1712 = vmatmul.mubr.f32.gmra.mxu0 %v1602
        %v1713 = vpop.f32.mrf.mxu0
        %v1714 = vadd.f32 %v611, %v1713
        %v1715 = vpop.f32.mrf.mxu0
        %v1716 = vadd.f32 %v611, %v1715
        %1717 = vmatprep.mubr.f32.mxu0 0.0
        %1718 = vmatmul.mubr.f32.gmra.mxu0 %v1603
        %v1719 = vpop.f32.mrf.mxu0
        %v1720 = vadd.f32 %v616, %v1719
        %v1721 = vpop.f32.mrf.mxu0
        %v1722 = vadd.f32 %v616, %v1721
        %1723 = vmatprep.mubr.f32.mxu0 0.0
        %1724 = vmatmul.mubr.f32.gmra.mxu0 %v1604
        %v1725 = vpop.f32.mrf.mxu0
        %v1726 = vadd.f32 %v621, %v1725
        %v1727 = vpop.f32.mrf.mxu0
        %v1728 = vadd.f32 %v621, %v1727
        %1729 = vmatprep.mubr.f32.mxu0 0.0
        %1730 = vmatmul.mubr.f32.gmra.mxu0 %v1605
        %v1731 = vpop.f32.mrf.mxu0
        %v1732 = vadd.f32 %v626, %v1731
        %v1733 = vpop.f32.mrf.mxu0
        %v1734 = vadd.f32 %v626, %v1733
        %1735 = vmatprep.mubr.f32.mxu0 0.0
        %1736 = vmatmul.mubr.f32.gmra.mxu0 %v1606
        %v1737 = vpop.f32.mrf.mxu0
        %v1738 = vadd.f32 %v631, %v1737
        %v1739 = vpop.f32.mrf.mxu0
        %v1740 = vadd.f32 %v631, %v1739
        %1741 = vmatprep.mubr.f32.mxu0 0.0
        %1742 = vmatmul.mubr.f32.gmra.mxu0 %v1607
        %v1743 = vpop.f32.mrf.mxu0
        %v1744 = vadd.f32 %v636, %v1743
        %v1745 = vpop.f32.mrf.mxu0
        %v1746 = vadd.f32 %v636, %v1745
        %1747 = vmatprep.mubr.f32.mxu0 0.0
        %1748 = vmatmul.mubr.f32.gmra.mxu0 %v1608
        %v1749 = vpop.f32.mrf.mxu0
        %v1750 = vadd.f32 %v641, %v1749
        %v1751 = vpop.f32.mrf.mxu0
        %v1752 = vadd.f32 %v641, %v1751
        %1753 = vdwg.mxu0
        %s1754 = scalar_lea.vmem %s241, 256 [#allocation8]
        %1755 = vst [vmem:[%s1754] sm:$0xff] %v1708
        %1756 = vst [vmem:[%s1754 + $0x8] sm:$0xff] %v1710
        %1757 = vst [vmem:[%s1754 + $0x10] sm:$0xff] %v1714
        %1758 = vst [vmem:[%s1754 + $0x18] sm:$0xff] %v1716
        %1759 = vst [vmem:[%s1754 + $0x20] sm:$0xff] %v1720
        %1760 = vst [vmem:[%s1754 + $0x28] sm:$0xff] %v1722
        %1761 = vst [vmem:[%s1754 + $0x30] sm:$0xff] %v1726
        %1762 = vst [vmem:[%s1754 + $0x38] sm:$0xff] %v1728
        %1763 = vst [vmem:[%s1754 + $0x40] sm:$0xff] %v1732
        %1764 = vst [vmem:[%s1754 + $0x48] sm:$0xff] %v1734
        %1765 = vst [vmem:[%s1754 + $0x50] sm:$0xff] %v1738
        %1766 = vst [vmem:[%s1754 + $0x58] sm:$0xff] %v1740
        %1767 = vst [vmem:[%s1754 + $0x60] sm:$0xff] %v1744
        %1768 = vst [vmem:[%s1754 + $0x68] sm:$0xff] %v1746
        %1769 = vst [vmem:[%s1754 + $0x70] sm:$0xff] %v1750
        %1770 = vst [vmem:[%s1754 + $0x78] sm:$0xff] %v1752
        %v1771 = vld [vmem:[%s210] sm:$0xff]
        %v1772 = vld [vmem:[%s210 + $0x8] sm:$0xff]
        %v1773 = vld [vmem:[%s210 + $0x10] sm:$0xff]
        %v1774 = vld [vmem:[%s210 + $0x18] sm:$0xff]
        %v1775 = vld [vmem:[%s210 + $0x20] sm:$0xff]
        %v1776 = vld [vmem:[%s210 + $0x28] sm:$0xff]
        %v1777 = vld [vmem:[%s210 + $0x30] sm:$0xff]
        %v1778 = vld [vmem:[%s210 + $0x38] sm:$0xff]
        %v1779 = vld [vmem:[%s210 + $0x40] sm:$0xff]
        %v1780 = vld [vmem:[%s210 + $0x48] sm:$0xff]
        %v1781 = vld [vmem:[%s210 + $0x50] sm:$0xff]
        %v1782 = vld [vmem:[%s210 + $0x58] sm:$0xff]
        %1795 = vrot.lane.b32.xlu0 %v1771, 111
        %v1796 = vpop.permute.xlu0 %1795
        %1797 = vrot.lane.b32.xlu0 %v1772, 111
        %v1798 = vpop.permute.xlu0 %1797
        %1799 = vrot.lane.b32.xlu0 %v1773, 111
        %v1800 = vpop.permute.xlu0 %1799
        %1801 = vrot.lane.b32.xlu0 %v1774, 111
        %v1802 = vpop.permute.xlu0 %1801
        %1803 = vrot.lane.b32.xlu0 %v1775, 111
        %v1804 = vpop.permute.xlu0 %1803
        %1805 = vrot.lane.b32.xlu0 %v1776, 111
        %v1806 = vpop.permute.xlu0 %1805
        %1807 = vrot.lane.b32.xlu0 %v1777, 111
        %v1808 = vpop.permute.xlu0 %1807
        %1809 = vrot.lane.b32.xlu0 %v1778, 111
        %v1810 = vpop.permute.xlu0 %1809
        %1811 = vrot.lane.b32.xlu0 %v1779, 111
        %v1812 = vpop.permute.xlu0 %1811
        %1813 = vrot.lane.b32.xlu0 %v1780, 111
        %v1814 = vpop.permute.xlu0 %1813
        %1815 = vrot.lane.b32.xlu0 %v1781, 111
        %v1816 = vpop.permute.xlu0 %1815
        %1817 = vrot.lane.b32.xlu0 %v1782, 111
        %v1818 = vpop.permute.xlu0 %1817
        %v1819 = vsel %vm538, %v1796, %v1798
        %v1820 = vsel %vm538, %v1798, %v1800
        %v1821 = vsel %vm538, %v1802, %v1804
        %v1822 = vsel %vm538, %v1804, %v1806
        %v1823 = vsel %vm538, %v1808, %v1810
        %v1824 = vsel %vm538, %v1810, %v1812
        %v1825 = vsel %vm538, %v1814, %v1816
        %v1826 = vsel %vm538, %v1816, %v1818
        %1835 = vst [vmem:[#allocation2] sm:$0xff] %v1819
        %1836 = vst [vmem:[#allocation2 + $0x8] sm:$0xff] %v1820
        %1837 = vst [vmem:[#allocation2 + $0x10] sm:$0xff] %v1821
        %1838 = vst [vmem:[#allocation2 + $0x18] sm:$0xff] %v1822
        %1839 = vst [vmem:[#allocation2 + $0x20] sm:$0xff] %v1823
        %1840 = vst [vmem:[#allocation2 + $0x28] sm:$0xff] %v1824
        %1841 = vst [vmem:[#allocation2 + $0x30] sm:$0xff] %v1825
        %1842 = vst [vmem:[#allocation2 + $0x38] sm:$0xff] %v1826
        %v1843 = vld [vmem:[%s210] sm:$0xff]
        %v1844 = vld [vmem:[%s210 + $0x8] sm:$0xff]
        %v1845 = vld [vmem:[%s210 + $0x10] sm:$0xff]
        %v1846 = vld [vmem:[%s210 + $0x18] sm:$0xff]
        %v1847 = vld [vmem:[%s210 + $0x20] sm:$0xff]
        %v1848 = vld [vmem:[%s210 + $0x28] sm:$0xff]
        %v1849 = vld [vmem:[%s210 + $0x30] sm:$0xff]
        %v1850 = vld [vmem:[%s210 + $0x38] sm:$0xff]
        %v1851 = vld [vmem:[%s210 + $0x40] sm:$0xff]
        %v1852 = vld [vmem:[%s210 + $0x48] sm:$0xff]
        %v1853 = vld [vmem:[%s210 + $0x50] sm:$0xff]
        %v1854 = vld [vmem:[%s210 + $0x58] sm:$0xff]
        %v1855 = vmul.f32 %v1843, %v1025
        %v1856 = vmul.f32 %v1844, %v1029
        %v1857 = vmul.f32 %v1845, %v1027
        %v1858 = vmul.f32 %v1846, %v1025
        %v1859 = vmul.f32 %v1847, %v1029
        %v1860 = vmul.f32 %v1848, %v1027
        %v1861 = vmul.f32 %v1849, %v1025
        %v1862 = vmul.f32 %v1850, %v1029
        %v1863 = vmul.f32 %v1851, %v1027
        %v1864 = vmul.f32 %v1852, %v1025
        %v1865 = vmul.f32 %v1853, %v1029
        %v1866 = vmul.f32 %v1854, %v1027
        %1879 = vrot.lane.b32.xlu0 %v1855, 110
        %v1880 = vpop.permute.xlu0 %1879
        %1881 = vrot.lane.b32.xlu0 %v1856, 110
        %v1882 = vpop.permute.xlu0 %1881
        %1883 = vrot.lane.b32.xlu0 %v1857, 110
        %v1884 = vpop.permute.xlu0 %1883
        %1885 = vrot.lane.b32.xlu0 %v1858, 110
        %v1886 = vpop.permute.xlu0 %1885
        %1887 = vrot.lane.b32.xlu0 %v1859, 110
        %v1888 = vpop.permute.xlu0 %1887
        %1889 = vrot.lane.b32.xlu0 %v1860, 110
        %v1890 = vpop.permute.xlu0 %1889
        %1891 = vrot.lane.b32.xlu0 %v1861, 110
        %v1892 = vpop.permute.xlu0 %1891
        %1893 = vrot.lane.b32.xlu0 %v1862, 110
        %v1894 = vpop.permute.xlu0 %1893
        %1895 = vrot.lane.b32.xlu0 %v1863, 110
        %v1896 = vpop.permute.xlu0 %1895
        %1897 = vrot.lane.b32.xlu0 %v1864, 110
        %v1898 = vpop.permute.xlu0 %1897
        %1899 = vrot.lane.b32.xlu0 %v1865, 110
        %v1900 = vpop.permute.xlu0 %1899
        %1901 = vrot.lane.b32.xlu0 %v1866, 110
        %v1902 = vpop.permute.xlu0 %1901
        %v1903 = vsel %vm1081, %v1880, %v1882
        %v1904 = vsel %vm1081, %v1882, %v1884
        %v1905 = vsel %vm1081, %v1886, %v1888
        %v1906 = vsel %vm1081, %v1888, %v1890
        %v1907 = vsel %vm1081, %v1892, %v1894
        %v1908 = vsel %vm1081, %v1894, %v1896
        %v1909 = vsel %vm1081, %v1898, %v1900
        %v1910 = vsel %vm1081, %v1900, %v1902
        %1919 = vst [vmem:[#allocation2 + $0x40] sm:$0xff] %v1903
        %1920 = vst [vmem:[#allocation2 + $0x48] sm:$0xff] %v1904
        %1921 = vst [vmem:[#allocation2 + $0x50] sm:$0xff] %v1905
        %1922 = vst [vmem:[#allocation2 + $0x58] sm:$0xff] %v1906
        %1923 = vst [vmem:[#allocation2 + $0x60] sm:$0xff] %v1907
        %1924 = vst [vmem:[#allocation2 + $0x68] sm:$0xff] %v1908
        %1925 = vst [vmem:[#allocation2 + $0x70] sm:$0xff] %v1909
        %1926 = vst [vmem:[#allocation2 + $0x78] sm:$0xff] %v1910
        %v1927 = vld [vmem:[%s210] sm:$0xff]
        %v1928 = vld [vmem:[%s210 + $0x8] sm:$0xff]
        %v1929 = vld [vmem:[%s210 + $0x10] sm:$0xff]
        %v1930 = vld [vmem:[%s210 + $0x18] sm:$0xff]
        %v1931 = vld [vmem:[%s210 + $0x20] sm:$0xff]
        %v1932 = vld [vmem:[%s210 + $0x28] sm:$0xff]
        %v1933 = vld [vmem:[%s210 + $0x30] sm:$0xff]
        %v1934 = vld [vmem:[%s210 + $0x38] sm:$0xff]
        %v1935 = vld [vmem:[%s210 + $0x40] sm:$0xff]
        %v1936 = vld [vmem:[%s210 + $0x48] sm:$0xff]
        %v1937 = vld [vmem:[%s210 + $0x50] sm:$0xff]
        %v1938 = vld [vmem:[%s210 + $0x58] sm:$0xff]
        %1951 = vrot.lane.b32.xlu0 %v1927, 95
        %v1952 = vpop.permute.xlu0 %1951
        %1953 = vrot.lane.b32.xlu0 %v1928, 95
        %v1954 = vpop.permute.xlu0 %1953
        %1955 = vrot.lane.b32.xlu0 %v1929, 95
        %v1956 = vpop.permute.xlu0 %1955
        %1957 = vrot.lane.b32.xlu0 %v1930, 95
        %v1958 = vpop.permute.xlu0 %1957
        %1959 = vrot.lane.b32.xlu0 %v1931, 95
        %v1960 = vpop.permute.xlu0 %1959
        %1961 = vrot.lane.b32.xlu0 %v1932, 95
        %v1962 = vpop.permute.xlu0 %1961
        %1963 = vrot.lane.b32.xlu0 %v1933, 95
        %v1964 = vpop.permute.xlu0 %1963
        %1965 = vrot.lane.b32.xlu0 %v1934, 95
        %v1966 = vpop.permute.xlu0 %1965
        %1967 = vrot.lane.b32.xlu0 %v1935, 95
        %v1968 = vpop.permute.xlu0 %1967
        %1969 = vrot.lane.b32.xlu0 %v1936, 95
        %v1970 = vpop.permute.xlu0 %1969
        %1971 = vrot.lane.b32.xlu0 %v1937, 95
        %v1972 = vpop.permute.xlu0 %1971
        %1973 = vrot.lane.b32.xlu0 %v1938, 95
        %v1974 = vpop.permute.xlu0 %1973
        %v1975 = vsel %vm1575, %v1952, %v1954
        %v1976 = vsel %vm1575, %v1954, %v1956
        %v1977 = vsel %vm1575, %v1958, %v1960
        %v1978 = vsel %vm1575, %v1960, %v1962
        %v1979 = vsel %vm1575, %v1964, %v1966
        %v1980 = vsel %vm1575, %v1966, %v1968
        %v1981 = vsel %vm1575, %v1970, %v1972
        %v1982 = vsel %vm1575, %v1972, %v1974
        %1991 = vst [vmem:[#allocation2 + $0x80] sm:$0xff] %v1975
        %1992 = vst [vmem:[#allocation2 + $0x88] sm:$0xff] %v1976
        %1993 = vst [vmem:[#allocation2 + $0x90] sm:$0xff] %v1977
        %1994 = vst [vmem:[#allocation2 + $0x98] sm:$0xff] %v1978
        %1995 = vst [vmem:[#allocation2 + $0xa0] sm:$0xff] %v1979
        %1996 = vst [vmem:[#allocation2 + $0xa8] sm:$0xff] %v1980
        %1997 = vst [vmem:[#allocation2 + $0xb0] sm:$0xff] %v1981
        %1998 = vst [vmem:[#allocation2 + $0xb8] sm:$0xff] %v1982
        %v1999 = vld [vmem:[%s210] sm:$0xff]
        %v2000 = vld [vmem:[%s210 + $0x8] sm:$0xff]
        %v2001 = vld [vmem:[%s210 + $0x10] sm:$0xff]
        %v2002 = vld [vmem:[%s210 + $0x18] sm:$0xff]
        %v2003 = vld [vmem:[%s210 + $0x20] sm:$0xff]
        %v2004 = vld [vmem:[%s210 + $0x28] sm:$0xff]
        %v2005 = vld [vmem:[%s210 + $0x30] sm:$0xff]
        %v2006 = vld [vmem:[%s210 + $0x38] sm:$0xff]
        %v2007 = vld [vmem:[%s210 + $0x40] sm:$0xff]
        %v2008 = vld [vmem:[%s210 + $0x48] sm:$0xff]
        %v2009 = vld [vmem:[%s210 + $0x50] sm:$0xff]
        %v2010 = vld [vmem:[%s210 + $0x58] sm:$0xff]
        %2011 = vrot.lane.b32.xlu0 %v287, 34
        %v2012 = vpop.permute.xlu0 %2011
        %2013 = vrot.lane.b32.xlu0 %v288, 34
        %v2014 = vpop.permute.xlu0 %2013
        %vm2015 = vcmask 277504
        %v2016 = vsel %vm2015, %v2012, %v2014
        %v2020 = vmul.f32 %v1999, %v2012
        %v2021 = vmul.f32 %v2000, %v2016
        %v2022 = vmul.f32 %v2001, %v2014
        %v2023 = vmul.f32 %v2002, %v2012
        %v2024 = vmul.f32 %v2003, %v2016
        %v2025 = vmul.f32 %v2004, %v2014
        %v2026 = vmul.f32 %v2005, %v2012
        %v2027 = vmul.f32 %v2006, %v2016
        %v2028 = vmul.f32 %v2007, %v2014
        %v2029 = vmul.f32 %v2008, %v2012
        %v2030 = vmul.f32 %v2009, %v2016
        %v2031 = vmul.f32 %v2010, %v2014
        %2044 = vrot.lane.b32.xlu0 %v2020, 94
        %v2045 = vpop.permute.xlu0 %2044
        %2046 = vrot.lane.b32.xlu0 %v2021, 94
        %v2047 = vpop.permute.xlu0 %2046
        %2048 = vrot.lane.b32.xlu0 %v2022, 94
        %v2049 = vpop.permute.xlu0 %2048
        %2050 = vrot.lane.b32.xlu0 %v2023, 94
        %v2051 = vpop.permute.xlu0 %2050
        %2052 = vrot.lane.b32.xlu0 %v2024, 94
        %v2053 = vpop.permute.xlu0 %2052
        %2054 = vrot.lane.b32.xlu0 %v2025, 94
        %v2055 = vpop.permute.xlu0 %2054
        %2056 = vrot.lane.b32.xlu0 %v2026, 94
        %v2057 = vpop.permute.xlu0 %2056
        %2058 = vrot.lane.b32.xlu0 %v2027, 94
        %v2059 = vpop.permute.xlu0 %2058
        %2060 = vrot.lane.b32.xlu0 %v2028, 94
        %v2061 = vpop.permute.xlu0 %2060
        %2062 = vrot.lane.b32.xlu0 %v2029, 94
        %v2063 = vpop.permute.xlu0 %2062
        %2064 = vrot.lane.b32.xlu0 %v2030, 94
        %v2065 = vpop.permute.xlu0 %2064
        %2066 = vrot.lane.b32.xlu0 %v2031, 94
        %v2067 = vpop.permute.xlu0 %2066
        %vm2068 = vcmask 769024
        %v2069 = vsel %vm2068, %v2045, %v2047
        %v2070 = vsel %vm2068, %v2047, %v2049
        %v2071 = vsel %vm2068, %v2051, %v2053
        %v2072 = vsel %vm2068, %v2053, %v2055
        %v2073 = vsel %vm2068, %v2057, %v2059
        %v2074 = vsel %vm2068, %v2059, %v2061
        %v2075 = vsel %vm2068, %v2063, %v2065
        %v2076 = vsel %vm2068, %v2065, %v2067
        %2085 = vst [vmem:[#allocation2 + $0xc0] sm:$0xff] %v2069
        %2086 = vst [vmem:[#allocation2 + $0xc8] sm:$0xff] %v2070
        %2087 = vst [vmem:[#allocation2 + $0xd0] sm:$0xff] %v2071
        %2088 = vst [vmem:[#allocation2 + $0xd8] sm:$0xff] %v2072
        %2089 = vst [vmem:[#allocation2 + $0xe0] sm:$0xff] %v2073
        %2090 = vst [vmem:[#allocation2 + $0xe8] sm:$0xff] %v2074
        %2091 = vst [vmem:[#allocation2 + $0xf0] sm:$0xff] %v2075
        %2092 = vst [vmem:[#allocation2 + $0xf8] sm:$0xff] %v2076
        %s2093 = scalar_lea.vmem [#allocation6], 192
        %v2094 = vld [vmem:[%s2093] sm:$0xff]
        %v2095 = vld [vmem:[%s2093 + $0x8] sm:$0xff]
        %v2096 = vld [vmem:[%s2093 + $0x10] sm:$0xff]
        %v2097 = vld [vmem:[%s2093 + $0x18] sm:$0xff]
        %v2098 = vld [vmem:[%s2093 + $0x20] sm:$0xff]
        %v2099 = vld [vmem:[%s2093 + $0x28] sm:$0xff]
        %v2100 = vld [vmem:[%s2093 + $0x30] sm:$0xff]
        %v2101 = vld [vmem:[%s2093 + $0x38] sm:$0xff]
        %v2102 = vld [vmem:[#allocation2] sm:$0xff]
        %v2103 = vld [vmem:[#allocation2 + $0x8] sm:$0xff]
        %v2104 = vld [vmem:[#allocation2 + $0x10] sm:$0xff]
        %v2105 = vld [vmem:[#allocation2 + $0x18] sm:$0xff]
        %v2106 = vld [vmem:[#allocation2 + $0x20] sm:$0xff]
        %v2107 = vld [vmem:[#allocation2 + $0x28] sm:$0xff]
        %v2108 = vld [vmem:[#allocation2 + $0x30] sm:$0xff]
        %v2109 = vld [vmem:[#allocation2 + $0x38] sm:$0xff]
        %v2110 = vld [vmem:[#allocation2 + $0x40] sm:$0xff]
        %v2111 = vld [vmem:[#allocation2 + $0x48] sm:$0xff]
        %v2112 = vld [vmem:[#allocation2 + $0x50] sm:$0xff]
        %v2113 = vld [vmem:[#allocation2 + $0x58] sm:$0xff]
        %v2114 = vld [vmem:[#allocation2 + $0x60] sm:$0xff]
        %v2115 = vld [vmem:[#allocation2 + $0x68] sm:$0xff]
        %v2116 = vld [vmem:[#allocation2 + $0x70] sm:$0xff]
        %v2117 = vld [vmem:[#allocation2 + $0x78] sm:$0xff]
        %v2118 = vld [vmem:[#allocation2 + $0x80] sm:$0xff]
        %v2119 = vld [vmem:[#allocation2 + $0x88] sm:$0xff]
        %v2120 = vld [vmem:[#allocation2 + $0x90] sm:$0xff]
        %v2121 = vld [vmem:[#allocation2 + $0x98] sm:$0xff]
        %v2122 = vld [vmem:[#allocation2 + $0xa0] sm:$0xff]
        %v2123 = vld [vmem:[#allocation2 + $0xa8] sm:$0xff]
        %v2124 = vld [vmem:[#allocation2 + $0xb0] sm:$0xff]
        %v2125 = vld [vmem:[#allocation2 + $0xb8] sm:$0xff]
        %v2126 = vld [vmem:[#allocation2 + $0xc0] sm:$0xff]
        %v2127 = vld [vmem:[#allocation2 + $0xc8] sm:$0xff]
        %v2128 = vld [vmem:[#allocation2 + $0xd0] sm:$0xff]
        %v2129 = vld [vmem:[#allocation2 + $0xd8] sm:$0xff]
        %v2130 = vld [vmem:[#allocation2 + $0xe0] sm:$0xff]
        %v2131 = vld [vmem:[#allocation2 + $0xe8] sm:$0xff]
        %v2132 = vld [vmem:[#allocation2 + $0xf0] sm:$0xff]
        %v2133 = vld [vmem:[#allocation2 + $0xf8] sm:$0xff]
        %2134 = vmatprep.subr.mxu0 %v2133
        %2135 = vmatpush1.msra.mxu0 %v2132
        %2136 = vmatprep.subr.mxu0 %v2131
        %2137 = vmatpush1.msra.mxu0 %v2130
        %2138 = vmatprep.subr.mxu0 %v2129
        %2139 = vmatpush1.msra.mxu0 %v2128
        %2140 = vmatprep.subr.mxu0 %v2127
        %2141 = vmatpush1.msra.mxu0 %v2126
        %2142 = vmatprep.subr.mxu0 %v2125
        %2143 = vmatpush1.msra.mxu0 %v2124
        %2144 = vmatprep.subr.mxu0 %v2123
        %2145 = vmatpush1.msra.mxu0 %v2122
        %2146 = vmatprep.subr.mxu0 %v2121
        %2147 = vmatpush1.msra.mxu0 %v2120
        %2148 = vmatprep.subr.mxu0 %v2119
        %2149 = vmatpush1.msra.mxu0 %v2118
        %2150 = vmatprep.subr.mxu0 %v2117
        %2151 = vmatpush1.msra.mxu0 %v2116
        %2152 = vmatprep.subr.mxu0 %v2115
        %2153 = vmatpush1.msra.mxu0 %v2114
        %2154 = vmatprep.subr.mxu0 %v2113
        %2155 = vmatpush1.msra.mxu0 %v2112
        %2156 = vmatprep.subr.mxu0 %v2111
        %2157 = vmatpush1.msra.mxu0 %v2110
        %2158 = vmatprep.subr.mxu0 %v2109
        %2159 = vmatpush1.msra.mxu0 %v2108
        %2160 = vmatprep.subr.mxu0 %v2107
        %2161 = vmatpush1.msra.mxu0 %v2106
        %2162 = vmatprep.subr.mxu0 %v2105
        %2163 = vmatpush1.msra.mxu0 %v2104
        %2164 = vmatprep.subr.mxu0 %v2103
        %2165 = vmatpush1.msra.mxu0 %v2102
        %2166 = vmatprep.subr.mxu0 0.0
        %2167 = vmatpush2.msra.mxu0 0.0
        %2168 = vmatprep.subr.mxu0 0.0
        %2169 = vmatpush2.msra.mxu0 0.0
        %2170 = vmatprep.subr.mxu0 0.0
        %2171 = vmatpush2.msra.mxu0 0.0
        %2172 = vmatprep.subr.mxu0 0.0
        %2173 = vmatpush2.msra.mxu0 0.0
        %2174 = vmatprep.subr.mxu0 0.0
        %2175 = vmatpush2.msra.mxu0 0.0
        %2176 = vmatprep.subr.mxu0 0.0
        %2177 = vmatpush2.msra.mxu0 0.0
        %2178 = vmatprep.subr.mxu0 0.0
        %2179 = vmatpush2.msra.mxu0 0.0
        %2180 = vmatprep.subr.mxu0 0.0
        %2181 = vmatpush2.msra.mxu0 0.0
        %2182 = vmatprep.subr.mxu0 0.0
        %2183 = vmatpush2.msra.mxu0 0.0
        %2184 = vmatprep.subr.mxu0 0.0
        %2185 = vmatpush2.msra.mxu0 0.0
        %2186 = vmatprep.subr.mxu0 0.0
        %2187 = vmatpush2.msra.mxu0 0.0
        %2188 = vmatprep.subr.mxu0 0.0
        %2189 = vmatpush2.msra.mxu0 0.0
        %2190 = vmatprep.subr.mxu0 0.0
        %2191 = vmatpush2.msra.mxu0 0.0
        %2192 = vmatprep.subr.mxu0 0.0
        %2193 = vmatpush2.msra.mxu0 0.0
        %2194 = vmatprep.subr.mxu0 0.0
        %2195 = vmatpush2.msra.mxu0 0.0
        %2196 = vmatprep.subr.mxu0 0.0
        %2197 = vmatpush2.msra.mxu0 0.0
        %2198 = vmatprep.mubr.f32.mxu0 0.0
        %2199 = vmatmul.mubr.f32.gmra.mxu0 %v2094
        %v2200 = vpop.f32.mrf.mxu0
        %v2201 = vadd.f32 %v606, %v2200
        %v2202 = vpop.f32.mrf.mxu0
        %v2203 = vadd.f32 %v606, %v2202
        %2204 = vmatprep.mubr.f32.mxu0 0.0
        %2205 = vmatmul.mubr.f32.gmra.mxu0 %v2095
        %v2206 = vpop.f32.mrf.mxu0
        %v2207 = vadd.f32 %v611, %v2206
        %v2208 = vpop.f32.mrf.mxu0
        %v2209 = vadd.f32 %v611, %v2208
        %2210 = vmatprep.mubr.f32.mxu0 0.0
        %2211 = vmatmul.mubr.f32.gmra.mxu0 %v2096
        %v2212 = vpop.f32.mrf.mxu0
        %v2213 = vadd.f32 %v616, %v2212
        %v2214 = vpop.f32.mrf.mxu0
        %v2215 = vadd.f32 %v616, %v2214
        %2216 = vmatprep.mubr.f32.mxu0 0.0
        %2217 = vmatmul.mubr.f32.gmra.mxu0 %v2097
        %v2218 = vpop.f32.mrf.mxu0
        %v2219 = vadd.f32 %v621, %v2218
        %v2220 = vpop.f32.mrf.mxu0
        %v2221 = vadd.f32 %v621, %v2220
        %2222 = vmatprep.mubr.f32.mxu0 0.0
        %2223 = vmatmul.mubr.f32.gmra.mxu0 %v2098
        %v2224 = vpop.f32.mrf.mxu0
        %v2225 = vadd.f32 %v626, %v2224
        %v2226 = vpop.f32.mrf.mxu0
        %v2227 = vadd.f32 %v626, %v2226
        %2228 = vmatprep.mubr.f32.mxu0 0.0
        %2229 = vmatmul.mubr.f32.gmra.mxu0 %v2099
        %v2230 = vpop.f32.mrf.mxu0
        %v2231 = vadd.f32 %v631, %v2230
        %v2232 = vpop.f32.mrf.mxu0
        %v2233 = vadd.f32 %v631, %v2232
        %2234 = vmatprep.mubr.f32.mxu0 0.0
        %2235 = vmatmul.mubr.f32.gmra.mxu0 %v2100
        %v2236 = vpop.f32.mrf.mxu0
        %v2237 = vadd.f32 %v636, %v2236
        %v2238 = vpop.f32.mrf.mxu0
        %v2239 = vadd.f32 %v636, %v2238
        %2240 = vmatprep.mubr.f32.mxu0 0.0
        %2241 = vmatmul.mubr.f32.gmra.mxu0 %v2101
        %v2242 = vpop.f32.mrf.mxu0
        %v2243 = vadd.f32 %v641, %v2242
        %v2244 = vpop.f32.mrf.mxu0
        %v2245 = vadd.f32 %v641, %v2244
        %2246 = vdwg.mxu0
        %s2247 = scalar_lea.vmem %s241, 384 [#allocation8]
        %2248 = vst [vmem:[%s2247] sm:$0xff] %v2201
        %2249 = vst [vmem:[%s2247 + $0x8] sm:$0xff] %v2203
        %2250 = vst [vmem:[%s2247 + $0x10] sm:$0xff] %v2207
        %2251 = vst [vmem:[%s2247 + $0x18] sm:$0xff] %v2209
        %2252 = vst [vmem:[%s2247 + $0x20] sm:$0xff] %v2213
        %2253 = vst [vmem:[%s2247 + $0x28] sm:$0xff] %v2215
        %2254 = vst [vmem:[%s2247 + $0x30] sm:$0xff] %v2219
        %2255 = vst [vmem:[%s2247 + $0x38] sm:$0xff] %v2221
        %2256 = vst [vmem:[%s2247 + $0x40] sm:$0xff] %v2225
        %2257 = vst [vmem:[%s2247 + $0x48] sm:$0xff] %v2227
        %2258 = vst [vmem:[%s2247 + $0x50] sm:$0xff] %v2231
        %2259 = vst [vmem:[%s2247 + $0x58] sm:$0xff] %v2233
        %2260 = vst [vmem:[%s2247 + $0x60] sm:$0xff] %v2237
        %2261 = vst [vmem:[%s2247 + $0x68] sm:$0xff] %v2239
        %2262 = vst [vmem:[%s2247 + $0x70] sm:$0xff] %v2243
        %2263 = vst [vmem:[%s2247 + $0x78] sm:$0xff] %v2245
        %s2264 = sand.u32 %s121, 1
        %s2265 = scalar_lea.sflag [#allocation5], %s2264
        %s2266 = sand.u32 %s121, 1
        %s2267 = smul.addr %s2266, 512
        %s2268 = scalar_lea.vmem [#allocation8], %s2267
        // Predicated region
        $region41: #{tpu_custom_call.1} parent=31 // pred_check
          %p2269 = pneg %p131
        $region42: #{tpu_custom_call.1} parent=31 // pred_check_branch
          %2271 = sbr.rel (%p2269) target = $region44
        $region43: #{tpu_custom_call.1} parent=31 // pred_region
          %s2272 = smul.u32 8, %s26
          %s2274 = ssub.s32 8192, 8192
          %2275 = vsyncadd %s2265, %s2274
          %s2276 = smul.addr %s2272, 2
          %s2277 = smul.addr %s25, 64
          %s2278 = sadd.s32 %s2276, %s2277
          %s2279 = smul.addr %s2278, 128
          %s2280 = scalar_lea.hbm %s3, %s2279
          %s2281 = sshll.u32 %s2268, 4
          %s2282 = int_to_ptr.vmem [resolvable:$true] %s2281
          %2287 = dma.vmem_to_hbm [thread:$0]  %s2282, 8192, %s2280, %s2265, 256, 256, 16
        $region44: #{tpu_custom_call.1} parent=31 // pred_fallthru
          _
      $region32: #{tpu_custom_call.1} parent=5 // pred_fallthru
        _
      %p2288 = scmp.le.s32.totalorder 2, %s16
      // Predicated region
      $region45: #{tpu_custom_call.1} parent=5 // pred_check
        %p2289 = pneg %p2288
      $region46: #{tpu_custom_call.1} parent=5 // pred_check_branch
        %2291 = sbr.rel (%p2289) target = $region48
      $region47: #{tpu_custom_call.1} parent=5 // pred_region
        %s2292 = ssub.s32 %s16, 2
        // Predicated region
        $region49: #{tpu_custom_call.1} parent=47 // pred_check
          %p2293 = pneg %p137
        $region50: #{tpu_custom_call.1} parent=47 // pred_check_branch
          %2295 = sbr.rel (%p2293) target = $region52
        $region51: #{tpu_custom_call.1} parent=47 // pred_region
          %s2296 = sand.u32 %s122, 1
          %s2297 = scalar_lea.sflag [#allocation5], %s2296
          %s2298 = sand.u32 %s122, 1
          %s2299 = smul.addr %s2298, 512
          %s2300 = scalar_lea.vmem [#allocation8], %s2299
          %2301 = dma.done %s2297, 8192
        $region52: #{tpu_custom_call.1} parent=47 // pred_fallthru
          _
      $region48: #{tpu_custom_call.1} parent=5 // pred_fallthru
        _
    $region6: #{tpu_custom_call.1} parent=1 // loop_footer
      %s20 = sadd.s32 1, %s16
    $region7: #{tpu_custom_call.1} parent=1 // loop_footer_branch
      %15 = sbr.rel target = $region3
    $region8: #{tpu_custom_call.1} parent=1 // loop_exit
      _
    %2302 = vsyncpa [#allocation4], 1
    %s2303 = scalar_lea.sflag [#allocation4], 1
    %2304 = vsyncpa %s2303, 1
    %2305 = vsyncpa [#allocation7], 1
    %2306 = vsyncpa [#allocation5], 1
    %s2307 = scalar_lea.sflag [#allocation5], 1
    %2308 = vsyncpa %s2307, 1

</llo_original>
